<compile_context>
chip_gen: v7x
topology: tpu7x:2x2x1
jax: 0.10.0
libtpu: 0.0.40
codegen_flags: <defaults>
</compile_context>

<pallas_src>
import inspect

import jax
import jax.numpy as jnp
from jax.experimental import pallas as pl
from jax.experimental.pallas import tpu as pltpu


def _round_up(x, m):
    return (x + m - 1) // m * m


try:
    _HAS_PIPELINE_MODE = (
        "pipeline_mode" in inspect.signature(pl.BlockSpec).parameters
        and hasattr(pl, "Buffered")
    )
except (TypeError, ValueError):
    _HAS_PIPELINE_MODE = False


def decoder_kernel(x_ref, w1_ref, b1_ref, w2_ref, b2_ref,
                   w3_ref, b3_ref, w4_ref, b4_ref, o_ref):
    # x tile arrives f32; cast to bf16 here (per-tile VPU cast, hidden under MXU
    # work) instead of a separate wrapper-side cast pass over all of x.
    x = x_ref[...].astype(jnp.bfloat16)
    # bf16 MXU operands, f32 accumulation; bias add + ReLU in f32.
    h = jnp.dot(x, w1_ref[...], preferred_element_type=jnp.float32) + b1_ref[...]
    h = jnp.maximum(h, 0.0).astype(jnp.bfloat16)
    h = jnp.dot(h, w2_ref[...], preferred_element_type=jnp.float32) + b2_ref[...]
    h = jnp.maximum(h, 0.0).astype(jnp.bfloat16)
    h = jnp.dot(h, w3_ref[...], preferred_element_type=jnp.float32) + b3_ref[...]
    h = jnp.maximum(h, 0.0).astype(jnp.bfloat16)
    # Output head is zero-padded to a full 128-lane width -> lane-dense, unmasked store.
    out = jnp.dot(h, w4_ref[...], preferred_element_type=jnp.float32) + b4_ref[...]
    o_ref[...] = out.astype(o_ref.dtype)


def _vmem_cap_bytes():
    # Only consulted when the VMEM estimate exceeds the smallest scoped default.
    try:
        phys = pltpu.get_tpu_info().vmem_capacity_bytes
    except Exception:  # info query unavailable -> assume the smallest physical (v7x 64 MiB)
        phys = 64 * 1024 * 1024
    return int(phys) * 3 // 4  # leave headroom for Mosaic internal scratch/semaphores


def _pick_tm(n, tm_max=1024):
    """Node-tile height: sublane-aligned, large (amortize ~0.35us/step), and yielding
    an even number of grid steps (>=2 when possible) so v7x's two TCs split evenly."""
    n8 = _round_up(n, 8)
    if n8 <= 8:
        return 8
    if n8 <= tm_max:
        return _round_up(pl.cdiv(n8, 2), 8)          # exactly 2 tiles for small graphs
    tm = tm_max
    while pl.cdiv(n, tm) % 2 != 0 and tm > 256:      # make the step count even
        tm //= 2
    return tm


def _build_decoder_call(n, h_dim, o_pad, tm, out_dtype, single_buffer_weights):
    def const_spec(shape):
        # Weight/bias block index never changes across the grid; Pallas already skips
        # the re-DMA.  Single-buffering additionally drops the redundant second VMEM
        # copy, which only becomes material at large H (>=512).
        if single_buffer_weights:
            return pl.BlockSpec(shape, lambda i: (0, 0), pipeline_mode=pl.Buffered(1))
        return pl.BlockSpec(shape, lambda i: (0, 0))

    wbuf = 1 if single_buffer_weights else 2
    vmem_est = (2 * tm * h_dim * 4                           # f32 x tile, double-buffered
                + 2 * tm * o_pad * 4                         # f32 out tile, double-buffered
                + (3 * h_dim * h_dim + h_dim * o_pad) * 2 * wbuf  # bf16 weights
                + (3 * h_dim + o_pad) * 4                    # f32 biases
                + 4 * tm * h_dim * 4)                        # f32 intermediates / headroom
    vmem_limit = None
    if vmem_est > 12 * 1024 * 1024:                          # below smallest scoped default
        vmem_limit = min(vmem_est * 3 // 2, _vmem_cap_bytes())

    cost = pl.CostEstimate(
        flops=2 * n * h_dim * (3 * h_dim + o_pad),
        transcendentals=0,
        bytes_accessed=(n * h_dim * 4
                        + (3 * h_dim * h_dim + h_dim * o_pad) * 2
                        + (3 * h_dim + o_pad) * 4
                        + n * o_pad * 4),
    )

    return pl.pallas_call(
        decoder_kernel,
        out_shape=jax.ShapeDtypeStruct((n, o_pad), out_dtype),
        grid_spec=pltpu.PrefetchScalarGridSpec(
            num_scalar_prefetch=0,
            grid=(pl.cdiv(n, tm),),
            in_specs=[
                pl.BlockSpec((tm, h_dim), lambda i: (i, 0)),          # f32 node tile
                const_spec((h_dim, h_dim)), const_spec((1, h_dim)),   # layer 1
                const_spec((h_dim, h_dim)), const_spec((1, h_dim)),   # layer 2
                const_spec((h_dim, h_dim)), const_spec((1, h_dim)),   # layer 3
                const_spec((h_dim, o_pad)), const_spec((1, o_pad)),   # output head (padded)
            ],
            out_specs=pl.BlockSpec((tm, o_pad), lambda i: (i, 0)),
        ),
        compiler_params=pltpu.CompilerParams(
            dimension_semantics=("parallel",),
            vmem_limit_bytes=vmem_limit),
        cost_estimate=cost,
    )


def decoder_forward(x, params, *, tm_max=1024):
    """x: (N, H) float32 node features.  params: (in,out) weights and (1,out) biases."""
    n, h_dim = x.shape
    o = params["w4"].shape[1]
    o_pad = _round_up(o, 128)          # lane-dense output head (O=2 -> 128 lanes)

    tm = _pick_tm(n, tm_max)

    # bf16 MXU-operand weights (tiny one-time casts); biases stay f32.
    w = lambda k: params[k].astype(jnp.bfloat16)
    b = lambda k: params[k].astype(jnp.float32)
    w4p = jnp.pad(w("w4"), ((0, 0), (0, o_pad - o)))
    b4p = jnp.pad(b("b4"), ((0, 0), (0, o_pad - o)))

    single_buffer = _HAS_PIPELINE_MODE and h_dim >= 512
    call = _build_decoder_call(n, h_dim, o_pad, tm, jnp.float32, single_buffer)
    out = call(x, w("w1"), b("b1"), w("w2"), b("b2"), w("w3"), b("b3"), w4p, b4p)
    # TODO(synk): for very large graphs the (N,128) padded f32 writeback ~doubles HBM
    # traffic vs the bit-identical (N*O//128, 128) view of the flat (N,O) buffer; switch
    # to that zero-extra-HBM layout (reshape the result in-kernel) if the decoder ever
    # becomes HBM-write-bound.
    return out[:, :o]


def init_params(key, hidden_size=128, output_size=2):
    """Deterministic synthetic init; weights stored as (in, out), i.e. W^T of torch."""
    ks = jax.random.split(key, 8)

    def lin(kw, kb, fan_in, fan_out):
        # mimic torch's uniform(-1/sqrt(fan_in), 1/sqrt(fan_in)) init
        bound = 1.0 / jnp.sqrt(fan_in)
        wgt = jax.random.uniform(kw, (fan_in, fan_out), jnp.float32, -bound, bound)
        bias = jax.random.uniform(kb, (1, fan_out), jnp.float32, -bound, bound)
        return wgt, bias

    w1, b1 = lin(ks[0], ks[1], hidden_size, hidden_size)
    w2, b2 = lin(ks[2], ks[3], hidden_size, hidden_size)
    w3, b3 = lin(ks[4], ks[5], hidden_size, hidden_size)
    w4, b4 = lin(ks[6], ks[7], hidden_size, output_size)
    return dict(w1=w1, b1=b1, w2=w2, b2=b2, w3=w3, b3=b3, w4=w4, b4=b4)


def decoder_ref_bf16(x, p):
    """Pure-JAX reference matching the kernel's dtype path (bf16 operands, f32 accum)."""
    def layer(h, wgt, bias, relu):
        y = jnp.dot(h.astype(jnp.bfloat16), wgt.astype(jnp.bfloat16),
                    preferred_element_type=jnp.float32) + bias
        return jnp.maximum(y, 0.0) if relu else y
    h = layer(x, p["w1"], p["b1"], True)
    h = layer(h, p["w2"], p["b2"], True)
    h = layer(h, p["w3"], p["b3"], True)
    return layer(h, p["w4"], p["b4"], False)


def decoder_ref_f32(x, p):
    h = jnp.maximum(x @ p["w1"] + p["b1"], 0.0)
    h = jnp.maximum(h @ p["w2"] + p["b2"], 0.0)
    h = jnp.maximum(h @ p["w3"] + p["b3"], 0.0)
    return h @ p["w4"] + p["b4"]


if __name__ == "__main__":
    key = jax.random.PRNGKey(0)
    kx, kp = jax.random.split(key)

    hidden_size = 128    # module default
    output_size = 2
    num_nodes = 1000     # small synthetic graph; deliberately ragged vs the node tile

    x = jax.random.normal(kx, (num_nodes, hidden_size), jnp.float32)
    params = init_params(kp, hidden_size, output_size)

    out = decoder_forward(x, params)
    out = jax.block_until_ready(out)

    assert out.shape == (num_nodes, output_size)
    # Tight check against a reference that follows the same bf16-operand / f32-accum path.
    ref = decoder_ref_bf16(x, params)
    assert jnp.allclose(out, ref, atol=1e-2, rtol=1e-2), float(jnp.max(jnp.abs(out - ref)))
    # Loose sanity check against full-f32 math (difference is bf16 operand rounding only).
    ref32 = decoder_ref_f32(x, params)
    assert jnp.allclose(out, ref32, atol=1e-1, rtol=1e-1)

    print("KERNEL_OK")
</pallas_src>

<mosaic_0001>
module attributes {stable_mosaic.version = 11 : i64} {
  func.func @decoder_kernel(%arg0: i32, %arg1: memref<504x128xf32, #tpu.memory_space<vmem>>, %arg2: memref<128x128xbf16, #tpu.memory_space<vmem>>, %arg3: memref<1x128xf32, #tpu.memory_space<vmem>>, %arg4: memref<128x128xbf16, #tpu.memory_space<vmem>>, %arg5: memref<1x128xf32, #tpu.memory_space<vmem>>, %arg6: memref<128x128xbf16, #tpu.memory_space<vmem>>, %arg7: memref<1x128xf32, #tpu.memory_space<vmem>>, %arg8: memref<128x128xbf16, #tpu.memory_space<vmem>>, %arg9: memref<1x128xf32, #tpu.memory_space<vmem>>, %arg10: memref<504x128xf32, #tpu.memory_space<vmem>>) attributes {dimension_semantics = [#tpu.dimension_semantics<parallel>], iteration_bounds = array<i64: 2>, scalar_prefetch = 0 : i64, scratch_operands = 0 : i64, tpu.core_type = #tpu.core_type<tc>, window_params = [{transform_indices = @transform_0, window_bounds = array<i64: 504, 128>}, {pipeline_mode = #tpu.pipeline_mode<synchronous>, transform_indices = @transform_1, window_bounds = array<i64: 128, 128>}, {pipeline_mode = #tpu.pipeline_mode<synchronous>, transform_indices = @transform_2, window_bounds = array<i64: 1, 128>}, {pipeline_mode = #tpu.pipeline_mode<synchronous>, transform_indices = @transform_3, window_bounds = array<i64: 128, 128>}, {pipeline_mode = #tpu.pipeline_mode<synchronous>, transform_indices = @transform_4, window_bounds = array<i64: 1, 128>}, {pipeline_mode = #tpu.pipeline_mode<synchronous>, transform_indices = @transform_5, window_bounds = array<i64: 128, 128>}, {pipeline_mode = #tpu.pipeline_mode<synchronous>, transform_indices = @transform_6, window_bounds = array<i64: 1, 128>}, {pipeline_mode = #tpu.pipeline_mode<synchronous>, transform_indices = @transform_7, window_bounds = array<i64: 128, 128>}, {pipeline_mode = #tpu.pipeline_mode<synchronous>, transform_indices = @transform_8, window_bounds = array<i64: 1, 128>}, {transform_indices = @transform_9, window_bounds = array<i64: 504, 128>}]} {
    %c0 = arith.constant 0 : index
    %c0_0 = arith.constant 0 : index
    %0 = vector.load %arg1[%c0, %c0_0] : memref<504x128xf32, #tpu.memory_space<vmem>>, vector<504x128xf32>
    %1 = arith.truncf %0 : vector<504x128xf32> to vector<504x128xbf16>
    %c0_1 = arith.constant 0 : index
    %c0_2 = arith.constant 0 : index
    %2 = vector.load %arg2[%c0_1, %c0_2] : memref<128x128xbf16, #tpu.memory_space<vmem>>, vector<128x128xbf16>
    %cst = arith.constant dense<0.000000e+00> : vector<504x128xf32>
    %3 = tpu.matmul %1, %2, %cst {dimension_numbers = #tpu.dot_dimension_numbers<[1], [0], [0], [1], [0, 0, 1, 1], [], []>} : vector<504x128xbf16>, vector<128x128xbf16>, vector<504x128xf32> -> vector<504x128xf32>
    %c0_3 = arith.constant 0 : index
    %c0_4 = arith.constant 0 : index
    %4 = vector.load %arg3[%c0_3, %c0_4] : memref<1x128xf32, #tpu.memory_space<vmem>>, vector<1x128xf32>
    %5 = vector.broadcast %4 : vector<1x128xf32> to vector<504x128xf32>
    %6 = arith.addf %3, %5 : vector<504x128xf32>
    %cst_5 = arith.constant 0.000000e+00 : f32
    %7 = vector.broadcast %cst_5 : f32 to vector<504x128xf32>
    %8 = arith.maximumf %6, %7 : vector<504x128xf32>
    %9 = arith.truncf %8 : vector<504x128xf32> to vector<504x128xbf16>
    %c0_6 = arith.constant 0 : index
    %c0_7 = arith.constant 0 : index
    %10 = vector.load %arg4[%c0_6, %c0_7] : memref<128x128xbf16, #tpu.memory_space<vmem>>, vector<128x128xbf16>
    %cst_8 = arith.constant dense<0.000000e+00> : vector<504x128xf32>
    %11 = tpu.matmul %9, %10, %cst_8 {dimension_numbers = #tpu.dot_dimension_numbers<[1], [0], [0], [1], [0, 0, 1, 1], [], []>} : vector<504x128xbf16>, vector<128x128xbf16>, vector<504x128xf32> -> vector<504x128xf32>
    %c0_9 = arith.constant 0 : index
    %c0_10 = arith.constant 0 : index
    %12 = vector.load %arg5[%c0_9, %c0_10] : memref<1x128xf32, #tpu.memory_space<vmem>>, vector<1x128xf32>
    %13 = vector.broadcast %12 : vector<1x128xf32> to vector<504x128xf32>
    %14 = arith.addf %11, %13 : vector<504x128xf32>
    %cst_11 = arith.constant 0.000000e+00 : f32
    %15 = vector.broadcast %cst_11 : f32 to vector<504x128xf32>
    %16 = arith.maximumf %14, %15 : vector<504x128xf32>
    %17 = arith.truncf %16 : vector<504x128xf32> to vector<504x128xbf16>
    %c0_12 = arith.constant 0 : index
    %c0_13 = arith.constant 0 : index
    %18 = vector.load %arg6[%c0_12, %c0_13] : memref<128x128xbf16, #tpu.memory_space<vmem>>, vector<128x128xbf16>
    %cst_14 = arith.constant dense<0.000000e+00> : vector<504x128xf32>
    %19 = tpu.matmul %17, %18, %cst_14 {dimension_numbers = #tpu.dot_dimension_numbers<[1], [0], [0], [1], [0, 0, 1, 1], [], []>} : vector<504x128xbf16>, vector<128x128xbf16>, vector<504x128xf32> -> vector<504x128xf32>
    %c0_15 = arith.constant 0 : index
    %c0_16 = arith.constant 0 : index
    %20 = vector.load %arg7[%c0_15, %c0_16] : memref<1x128xf32, #tpu.memory_space<vmem>>, vector<1x128xf32>
    %21 = vector.broadcast %20 : vector<1x128xf32> to vector<504x128xf32>
    %22 = arith.addf %19, %21 : vector<504x128xf32>
    %cst_17 = arith.constant 0.000000e+00 : f32
    %23 = vector.broadcast %cst_17 : f32 to vector<504x128xf32>
    %24 = arith.maximumf %22, %23 : vector<504x128xf32>
    %25 = arith.truncf %24 : vector<504x128xf32> to vector<504x128xbf16>
    %c0_18 = arith.constant 0 : index
    %c0_19 = arith.constant 0 : index
    %26 = vector.load %arg8[%c0_18, %c0_19] : memref<128x128xbf16, #tpu.memory_space<vmem>>, vector<128x128xbf16>
    %cst_20 = arith.constant dense<0.000000e+00> : vector<504x128xf32>
    %27 = tpu.matmul %25, %26, %cst_20 {dimension_numbers = #tpu.dot_dimension_numbers<[1], [0], [0], [1], [0, 0, 1, 1], [], []>} : vector<504x128xbf16>, vector<128x128xbf16>, vector<504x128xf32> -> vector<504x128xf32>
    %c0_21 = arith.constant 0 : index
    %c0_22 = arith.constant 0 : index
    %28 = vector.load %arg9[%c0_21, %c0_22] : memref<1x128xf32, #tpu.memory_space<vmem>>, vector<1x128xf32>
    %29 = vector.broadcast %28 : vector<1x128xf32> to vector<504x128xf32>
    %30 = arith.addf %27, %29 : vector<504x128xf32>
    %c0_23 = arith.constant 0 : index
    %c0_24 = arith.constant 0 : index
    %31 = vector.load %arg10[%c0_23, %c0_24] : memref<504x128xf32, #tpu.memory_space<vmem>>, vector<504x128xf32>
    tpu.vector_store %arg10[%c0_23, %c0_24], %30 {strides = array<i32>} : memref<504x128xf32, #tpu.memory_space<vmem>>, vector<504x128xf32>,
    return
  }
  func.func @transform_0(%arg0: i32) -> (i32, i32) {
    %c0_i32 = arith.constant 0 : i32
    %c0_i32_0 = arith.constant 0 : i32
    return %arg0, %c0_i32 : i32, i32
  }
  func.func @transform_1(%arg0: i32) -> (i32, i32) {
    %c0_i32 = arith.constant 0 : i32
    %c0_i32_0 = arith.constant 0 : i32
    %c0_i32_1 = arith.constant 0 : i32
    return %c0_i32, %c0_i32_0 : i32, i32
  }
  func.func @transform_2(%arg0: i32) -> (i32, i32) {
    %c0_i32 = arith.constant 0 : i32
    %c0_i32_0 = arith.constant 0 : i32
    %c0_i32_1 = arith.constant 0 : i32
    return %c0_i32, %c0_i32_0 : i32, i32
  }
  func.func @transform_3(%arg0: i32) -> (i32, i32) {
    %c0_i32 = arith.constant 0 : i32
    %c0_i32_0 = arith.constant 0 : i32
    %c0_i32_1 = arith.constant 0 : i32
    return %c0_i32, %c0_i32_0 : i32, i32
  }
  func.func @transform_4(%arg0: i32) -> (i32, i32) {
    %c0_i32 = arith.constant 0 : i32
    %c0_i32_0 = arith.constant 0 : i32
    %c0_i32_1 = arith.constant 0 : i32
    return %c0_i32, %c0_i32_0 : i32, i32
  }
  func.func @transform_5(%arg0: i32) -> (i32, i32) {
    %c0_i32 = arith.constant 0 : i32
    %c0_i32_0 = arith.constant 0 : i32
    %c0_i32_1 = arith.constant 0 : i32
    return %c0_i32, %c0_i32_0 : i32, i32
  }
  func.func @transform_6(%arg0: i32) -> (i32, i32) {
    %c0_i32 = arith.constant 0 : i32
    %c0_i32_0 = arith.constant 0 : i32
    %c0_i32_1 = arith.constant 0 : i32
    return %c0_i32, %c0_i32_0 : i32, i32
  }
  func.func @transform_7(%arg0: i32) -> (i32, i32) {
    %c0_i32 = arith.constant 0 : i32
    %c0_i32_0 = arith.constant 0 : i32
    %c0_i32_1 = arith.constant 0 : i32
    return %c0_i32, %c0_i32_0 : i32, i32
  }
  func.func @transform_8(%arg0: i32) -> (i32, i32) {
    %c0_i32 = arith.constant 0 : i32
    %c0_i32_0 = arith.constant 0 : i32
    %c0_i32_1 = arith.constant 0 : i32
    return %c0_i32, %c0_i32_0 : i32, i32
  }
  func.func @transform_9(%arg0: i32) -> (i32, i32) {
    %c0_i32 = arith.constant 0 : i32
    %c0_i32_0 = arith.constant 0 : i32
    return %arg0, %c0_i32 : i32, i32
  }
}

</mosaic_0001>

<llo_original>
// kernel: tpu_custom_call.1
$region0: #{tpu_custom_call.1}
  #allocation0 [shape = 'u32[]', space=smem, size = 0x4, offset = 0x4, fixed_abs, tag = 'smem constant byte address 0x4 - core index']
  #allocation1 [shape = 'u32[144,128]{1,0:T(1,128)}', space=vmem, size = 0x12000, scoped, tag = 'internal scratch']
  %s0 = inlined_call_operand.hbm [shape: f32[1000,128], index: 0, kind: input, shape index: {}]
  %s1 = inlined_call_operand.hbm [shape: bf16[128,128], index: 1, kind: input, shape index: {}]
  %s2 = inlined_call_operand.vmem [shape: f32[1,128], index: 2, kind: input, shape index: {}]
  %s3 = inlined_call_operand.hbm [shape: bf16[128,128], index: 3, kind: input, shape index: {}]
  %s4 = inlined_call_operand.vmem [shape: f32[1,128], index: 4, kind: input, shape index: {}]
  %s5 = inlined_call_operand.hbm [shape: bf16[128,128], index: 5, kind: input, shape index: {}]
  %s6 = inlined_call_operand.vmem [shape: f32[1,128], index: 6, kind: input, shape index: {}]
  %s7 = inlined_call_operand.hbm [shape: bf16[128,128], index: 7, kind: input, shape index: {}]
  %s8 = inlined_call_operand.vmem [shape: f32[1,128], index: 8, kind: input, shape index: {}]
  %s9 = inlined_call_operand.hbm [shape: f32[1000,128], index: 9, kind: output, shape index: {}]
  %s10 = sld [smem:[#allocation0]]
  $region89: #{tpu_custom_call.1} parent=0
    _
  %s12 = ssub.s32 1, %s10
  %s13 = scalar_select 0, %s12, %s10
  $region1: #{tpu_custom_call.1} parent=0
    #allocation2 [shape = 'u8[516096]{0}', space=vmem, size = 0x7e000, scoped, tag = 'input window, operand 0']
    #allocation3 [shape = 's32[2]{0}', space=sflag, size = 0x8, scoped, tag = 'scoped memory for tpu_custom_call.1']
    #allocation4 [shape = 's32[2]{0}', space=sflag, size = 0x8, scoped, tag = 'scoped memory for tpu_custom_call.1']
    #allocation5 [shape = 'u8[32768]{0}', space=vmem, size = 0x8000, scoped, tag = 'input window, operand 1, single buffered']
    #allocation6 [shape = 's32[1]{0}', space=sflag, size = 0x4, scoped, tag = 'scoped memory for tpu_custom_call.1']
    #allocation7 [shape = 'u8[32768]{0}', space=vmem, size = 0x8000, scoped, tag = 'input window, operand 3, single buffered']
    #allocation8 [shape = 'u8[32768]{0}', space=vmem, size = 0x8000, scoped, tag = 'input window, operand 5, single buffered']
    #allocation9 [shape = 's32[1]{0}', space=sflag, size = 0x4, scoped, tag = 'scoped memory for tpu_custom_call.1']
    #allocation10 [shape = 'u8[32768]{0}', space=vmem, size = 0x8000, scoped, tag = 'input window, operand 7, single buffered']
    #allocation11 [shape = 'u8[516096]{0}', space=vmem, size = 0x7e000, scoped, tag = 'output window, operand 0']
    %14 = vsyncpa [#allocation3], 0
    %s15 = scalar_lea.sflag [#allocation3], 1
    %16 = vsyncpa %s15, 0
    %17 = vsyncpa [#allocation6], 0
    %18 = vsyncpa [#allocation9], 0
    %19 = vsyncpa [#allocation4], 0
    %s20 = scalar_lea.sflag [#allocation4], 1
    %21 = vsyncpa %s20, 0
    loop: start=0, step=1, limit=4
    $region2: #{tpu_custom_call.1} parent=1 // loop_pre_header
      _
    $region3: #{tpu_custom_call.1} parent=1 // loop_header
      %s23 = sphi 0, %s27
      %p24 = scmp.ge.s32.totalorder %s23, 4
      %s33 = sphi 0, %s35
      %s36 = sphi 0, %s33
      %s37 = sphi 0, %s36
      %s53 = sphi 0, %s37
      %s57 = sphi 0, %s57
      %s59 = sphi 0, %s57
      %s60 = sphi 0, %s59
      %s74 = sphi 0, %s60
      %s78 = sphi 0, %s78
      %s80 = sphi 0, %s78
      %s81 = sphi 0, %s80
      %s95 = sphi 0, %s81
      %s99 = sphi 0, %s99
      %s101 = sphi 0, %s99
      %s102 = sphi 0, %s101
      %s116 = sphi 0, %s102
      %s120 = sphi 0, %s120
      %s122 = sphi 0, %s120
      %s123 = sphi 0, %s122
      %s137 = sphi 0, %s123
      %s141 = sphi 0, %s141
      %s143 = sphi 0, %s141
      %s144 = sphi 0, %s143
      %s158 = sphi 0, %s144
      %s162 = sphi 0, %s162
      %s164 = sphi 0, %s162
      %s165 = sphi 0, %s164
      %s179 = sphi 0, %s165
      %s183 = sphi 0, %s183
      %s185 = sphi 0, %s183
      %s186 = sphi 0, %s185
      %s200 = sphi 0, %s186
      %s204 = sphi 0, %s204
      %s206 = sphi 0, %s204
      %s207 = sphi 0, %s206
      %s221 = sphi 0, %s207
      %s227 = sphi 0, %s229
      %s230 = sphi 0, %s227
      %s231 = sphi 0, %s230
      %s247 = sphi 0, %s231
    $region4: #{tpu_custom_call.1} parent=1 // loop_header_branch
      %26 = sbr.rel (%p24) target = $region8
    $region5: #{tpu_custom_call.1} parent=1 // loop_body
      %s28 = ssub.s32 %s23, 1
      %s29 = ssub.s32 %s23, 2
      %s30 = sadd.s32 %s23, 1
      %s31 = ssub.s32 %s23, %s30
      %p32 = scmp.eq.s32.totalorder %s31, 0
      %s34 = sadd.s32 %s33, 1
      %s35 = scalar_select %p32, %s33, %s34
      %p38 = pneg %p32
      %p39 = scmp.eq.s32.totalorder %s23, 1
      %p40 = por %p38, %p39
      %p41 = scmp.ne.s32.totalorder %s33, %s36
      %p42 = scmp.eq.s32.totalorder %s23, 0
      %p43 = por %p41, %p42
      %p44 = scmp.ne.s32.totalorder %s33, %s36
      %p45 = scmp.eq.s32.totalorder %s28, 1
      %p46 = por %p44, %p45
      %p47 = scmp.ne.s32.totalorder %s36, %s37
      %p48 = scmp.eq.s32.totalorder %s28, 0
      %p49 = por %p47, %p48
      %p50 = scmp.ne.s32.totalorder %s36, %s37
      %p51 = scmp.eq.s32.totalorder %s29, 1
      %p52 = por %p50, %p51
      %p54 = scmp.ne.s32.totalorder %s37, %s53
      %p55 = scmp.eq.s32.totalorder %s29, 0
      %p56 = por %p54, %p55
      %s58 = sadd.s32 %s57, 1
      %p61 = scmp.eq.s32.totalorder %s23, 1
      %p62 = scmp.ne.s32.totalorder %s57, %s59
      %p63 = scmp.eq.s32.totalorder %s23, 0
      %p64 = por %p62, %p63
      %p65 = scmp.ne.s32.totalorder %s57, %s59
      %p66 = scmp.eq.s32.totalorder %s28, 1
      %p67 = por %p65, %p66
      %p68 = scmp.ne.s32.totalorder %s59, %s60
      %p69 = scmp.eq.s32.totalorder %s28, 0
      %p70 = por %p68, %p69
      %p71 = scmp.ne.s32.totalorder %s59, %s60
      %p72 = scmp.eq.s32.totalorder %s29, 1
      %p73 = por %p71, %p72
      %p75 = scmp.ne.s32.totalorder %s60, %s74
      %p76 = scmp.eq.s32.totalorder %s29, 0
      %p77 = por %p75, %p76
      %s79 = sadd.s32 %s78, 1
      %p82 = scmp.eq.s32.totalorder %s23, 1
      %p83 = scmp.ne.s32.totalorder %s78, %s80
      %p84 = scmp.eq.s32.totalorder %s23, 0
      %p85 = por %p83, %p84
      %p86 = scmp.ne.s32.totalorder %s78, %s80
      %p87 = scmp.eq.s32.totalorder %s28, 1
      %p88 = por %p86, %p87
      %p89 = scmp.ne.s32.totalorder %s80, %s81
      %p90 = scmp.eq.s32.totalorder %s28, 0
      %p91 = por %p89, %p90
      %p92 = scmp.ne.s32.totalorder %s80, %s81
      %p93 = scmp.eq.s32.totalorder %s29, 1
      %p94 = por %p92, %p93
      %p96 = scmp.ne.s32.totalorder %s81, %s95
      %p97 = scmp.eq.s32.totalorder %s29, 0
      %p98 = por %p96, %p97
      %s100 = sadd.s32 %s99, 1
      %p103 = scmp.eq.s32.totalorder %s23, 1
      %p104 = scmp.ne.s32.totalorder %s99, %s101
      %p105 = scmp.eq.s32.totalorder %s23, 0
      %p106 = por %p104, %p105
      %p107 = scmp.ne.s32.totalorder %s99, %s101
      %p108 = scmp.eq.s32.totalorder %s28, 1
      %p109 = por %p107, %p108
      %p110 = scmp.ne.s32.totalorder %s101, %s102
      %p111 = scmp.eq.s32.totalorder %s28, 0
      %p112 = por %p110, %p111
      %p113 = scmp.ne.s32.totalorder %s101, %s102
      %p114 = scmp.eq.s32.totalorder %s29, 1
      %p115 = por %p113, %p114
      %p117 = scmp.ne.s32.totalorder %s102, %s116
      %p118 = scmp.eq.s32.totalorder %s29, 0
      %p119 = por %p117, %p118
      %s121 = sadd.s32 %s120, 1
      %p124 = scmp.eq.s32.totalorder %s23, 1
      %p125 = scmp.ne.s32.totalorder %s120, %s122
      %p126 = scmp.eq.s32.totalorder %s23, 0
      %p127 = por %p125, %p126
      %p128 = scmp.ne.s32.totalorder %s120, %s122
      %p129 = scmp.eq.s32.totalorder %s28, 1
      %p130 = por %p128, %p129
      %p131 = scmp.ne.s32.totalorder %s122, %s123
      %p132 = scmp.eq.s32.totalorder %s28, 0
      %p133 = por %p131, %p132
      %p134 = scmp.ne.s32.totalorder %s122, %s123
      %p135 = scmp.eq.s32.totalorder %s29, 1
      %p136 = por %p134, %p135
      %p138 = scmp.ne.s32.totalorder %s123, %s137
      %p139 = scmp.eq.s32.totalorder %s29, 0
      %p140 = por %p138, %p139
      %s142 = sadd.s32 %s141, 1
      %p145 = scmp.eq.s32.totalorder %s23, 1
      %p146 = scmp.ne.s32.totalorder %s141, %s143
      %p147 = scmp.eq.s32.totalorder %s23, 0
      %p148 = por %p146, %p147
      %p149 = scmp.ne.s32.totalorder %s141, %s143
      %p150 = scmp.eq.s32.totalorder %s28, 1
      %p151 = por %p149, %p150
      %p152 = scmp.ne.s32.totalorder %s143, %s144
      %p153 = scmp.eq.s32.totalorder %s28, 0
      %p154 = por %p152, %p153
      %p155 = scmp.ne.s32.totalorder %s143, %s144
      %p156 = scmp.eq.s32.totalorder %s29, 1
      %p157 = por %p155, %p156
      %p159 = scmp.ne.s32.totalorder %s144, %s158
      %p160 = scmp.eq.s32.totalorder %s29, 0
      %p161 = por %p159, %p160
      %s163 = sadd.s32 %s162, 1
      %p166 = scmp.eq.s32.totalorder %s23, 1
      %p167 = scmp.ne.s32.totalorder %s162, %s164
      %p168 = scmp.eq.s32.totalorder %s23, 0
      %p169 = por %p167, %p168
      %p170 = scmp.ne.s32.totalorder %s162, %s164
      %p171 = scmp.eq.s32.totalorder %s28, 1
      %p172 = por %p170, %p171
      %p173 = scmp.ne.s32.totalorder %s164, %s165
      %p174 = scmp.eq.s32.totalorder %s28, 0
      %p175 = por %p173, %p174
      %p176 = scmp.ne.s32.totalorder %s164, %s165
      %p177 = scmp.eq.s32.totalorder %s29, 1
      %p178 = por %p176, %p177
      %p180 = scmp.ne.s32.totalorder %s165, %s179
      %p181 = scmp.eq.s32.totalorder %s29, 0
      %p182 = por %p180, %p181
      %s184 = sadd.s32 %s183, 1
      %p187 = scmp.eq.s32.totalorder %s23, 1
      %p188 = scmp.ne.s32.totalorder %s183, %s185
      %p189 = scmp.eq.s32.totalorder %s23, 0
      %p190 = por %p188, %p189
      %p191 = scmp.ne.s32.totalorder %s183, %s185
      %p192 = scmp.eq.s32.totalorder %s28, 1
      %p193 = por %p191, %p192
      %p194 = scmp.ne.s32.totalorder %s185, %s186
      %p195 = scmp.eq.s32.totalorder %s28, 0
      %p196 = por %p194, %p195
      %p197 = scmp.ne.s32.totalorder %s185, %s186
      %p198 = scmp.eq.s32.totalorder %s29, 1
      %p199 = por %p197, %p198
      %p201 = scmp.ne.s32.totalorder %s186, %s200
      %p202 = scmp.eq.s32.totalorder %s29, 0
      %p203 = por %p201, %p202
      %s205 = sadd.s32 %s204, 1
      %p208 = scmp.eq.s32.totalorder %s23, 1
      %p209 = scmp.ne.s32.totalorder %s204, %s206
      %p210 = scmp.eq.s32.totalorder %s23, 0
      %p211 = por %p209, %p210
      %p212 = scmp.ne.s32.totalorder %s204, %s206
      %p213 = scmp.eq.s32.totalorder %s28, 1
      %p214 = por %p212, %p213
      %p215 = scmp.ne.s32.totalorder %s206, %s207
      %p216 = scmp.eq.s32.totalorder %s28, 0
      %p217 = por %p215, %p216
      %p218 = scmp.ne.s32.totalorder %s206, %s207
      %p219 = scmp.eq.s32.totalorder %s29, 1
      %p220 = por %p218, %p219
      %p222 = scmp.ne.s32.totalorder %s207, %s221
      %p223 = scmp.eq.s32.totalorder %s29, 0
      %p224 = por %p222, %p223
      %s225 = ssub.s32 %s23, %s30
      %p226 = scmp.eq.s32.totalorder %s225, 0
      %s228 = sadd.s32 %s227, 1
      %s229 = scalar_select %p226, %s227, %s228
      %p232 = pneg %p226
      %p233 = scmp.eq.s32.totalorder %s23, 1
      %p234 = por %p232, %p233
      %p235 = scmp.ne.s32.totalorder %s227, %s230
      %p236 = scmp.eq.s32.totalorder %s23, 0
      %p237 = por %p235, %p236
      %p238 = scmp.ne.s32.totalorder %s227, %s230
      %p239 = scmp.eq.s32.totalorder %s28, 1
      %p240 = por %p238, %p239
      %p241 = scmp.ne.s32.totalorder %s230, %s231
      %p242 = scmp.eq.s32.totalorder %s28, 0
      %p243 = por %p241, %p242
      %p244 = scmp.ne.s32.totalorder %s230, %s231
      %p245 = scmp.eq.s32.totalorder %s29, 1
      %p246 = por %p244, %p245
      %p248 = scmp.ne.s32.totalorder %s231, %s247
      %p249 = scmp.eq.s32.totalorder %s29, 0
      %p250 = por %p248, %p249
      %p251 = scmp.le.s32.totalorder 1, %s23
      %p252 = scmp.lt.s32.totalorder %s23, 3
      %p253 = pnand %p251, %p252
      %p254 = pneg %p253
      // Predicated region
      $region9: #{tpu_custom_call.1} parent=5 // pred_check
        _
      $region10: #{tpu_custom_call.1} parent=5 // pred_check_branch
        %256 = sbr.rel (%p253) target = $region12
      $region11: #{tpu_custom_call.1} parent=5 // pred_region
        %s257 = ssub.s32 %s23, 1
        // Predicated region
        $region13: #{tpu_custom_call.1} parent=11 // pred_check
          %p258 = pneg %p70
        $region14: #{tpu_custom_call.1} parent=11 // pred_check_branch
          %260 = sbr.rel (%p258) target = $region16
        $region15: #{tpu_custom_call.1} parent=11 // pred_region
          %s262 = ssub.s32 1024, 1024
          %263 = vsyncadd [#allocation6], %s262
          %s264 = sshll.u32 [#allocation5], 4
          %s265 = int_to_ptr.vmem [resolvable:$true] %s264
          %270 = dma.hbm_to_vmem [thread:$0]  %s1, 1024, %s265, [#allocation6], 64, 64, 4
        $region16: #{tpu_custom_call.1} parent=11 // pred_fallthru
          _
        // Predicated region
        $region17: #{tpu_custom_call.1} parent=11 // pred_check
          %p271 = pneg %p91
        $region18: #{tpu_custom_call.1} parent=11 // pred_check_branch
          %273 = sbr.rel (%p271) target = $region20
        $region19: #{tpu_custom_call.1} parent=11 // pred_region
          _
        $region20: #{tpu_custom_call.1} parent=11 // pred_fallthru
          _
        // Predicated region
        $region21: #{tpu_custom_call.1} parent=11 // pred_check
          %p274 = pneg %p112
        $region22: #{tpu_custom_call.1} parent=11 // pred_check_branch
          %276 = sbr.rel (%p274) target = $region24
        $region23: #{tpu_custom_call.1} parent=11 // pred_region
          %s278 = ssub.s32 1024, 1024
          %279 = vsyncadd [#allocation6], %s278
          %s280 = sshll.u32 [#allocation7], 4
          %s281 = int_to_ptr.vmem [resolvable:$true] %s280
          %286 = dma.hbm_to_vmem [thread:$0]  %s3, 1024, %s281, [#allocation6], 64, 64, 4
        $region24: #{tpu_custom_call.1} parent=11 // pred_fallthru
          _
        // Predicated region
        $region25: #{tpu_custom_call.1} parent=11 // pred_check
          %p287 = pneg %p133
        $region26: #{tpu_custom_call.1} parent=11 // pred_check_branch
          %289 = sbr.rel (%p287) target = $region28
        $region27: #{tpu_custom_call.1} parent=11 // pred_region
          _
        $region28: #{tpu_custom_call.1} parent=11 // pred_fallthru
          _
        // Predicated region
        $region29: #{tpu_custom_call.1} parent=11 // pred_check
          %p290 = pneg %p154
        $region30: #{tpu_custom_call.1} parent=11 // pred_check_branch
          %292 = sbr.rel (%p290) target = $region32
        $region31: #{tpu_custom_call.1} parent=11 // pred_region
          %s294 = ssub.s32 1024, 1024
          %295 = vsyncadd [#allocation9], %s294
          %s296 = sshll.u32 [#allocation8], 4
          %s297 = int_to_ptr.vmem [resolvable:$true] %s296
          %302 = dma.hbm_to_vmem [thread:$0]  %s5, 1024, %s297, [#allocation9], 64, 64, 4
        $region32: #{tpu_custom_call.1} parent=11 // pred_fallthru
          _
        // Predicated region
        $region33: #{tpu_custom_call.1} parent=11 // pred_check
          %p303 = pneg %p175
        $region34: #{tpu_custom_call.1} parent=11 // pred_check_branch
          %305 = sbr.rel (%p303) target = $region36
        $region35: #{tpu_custom_call.1} parent=11 // pred_region
          _
        $region36: #{tpu_custom_call.1} parent=11 // pred_fallthru
          _
        // Predicated region
        $region37: #{tpu_custom_call.1} parent=11 // pred_check
          %p306 = pneg %p196
        $region38: #{tpu_custom_call.1} parent=11 // pred_check_branch
          %308 = sbr.rel (%p306) target = $region40
        $region39: #{tpu_custom_call.1} parent=11 // pred_region
          %s310 = ssub.s32 1024, 1024
          %311 = vsyncadd [#allocation9], %s310
          %s312 = sshll.u32 [#allocation10], 4
          %s313 = int_to_ptr.vmem [resolvable:$true] %s312
          %318 = dma.hbm_to_vmem [thread:$0]  %s7, 1024, %s313, [#allocation9], 64, 64, 4
        $region40: #{tpu_custom_call.1} parent=11 // pred_fallthru
          _
        // Predicated region
        $region41: #{tpu_custom_call.1} parent=11 // pred_check
          %p319 = pneg %p217
        $region42: #{tpu_custom_call.1} parent=11 // pred_check_branch
          %321 = sbr.rel (%p319) target = $region44
        $region43: #{tpu_custom_call.1} parent=11 // pred_region
          _
        $region44: #{tpu_custom_call.1} parent=11 // pred_fallthru
          _
      $region12: #{tpu_custom_call.1} parent=5 // pred_fallthru
        _
      %p322 = scmp.lt.s32.totalorder %s23, 2
      // Predicated region
      $region45: #{tpu_custom_call.1} parent=5 // pred_check
        %p323 = pneg %p322
      $region46: #{tpu_custom_call.1} parent=5 // pred_check_branch
        %325 = sbr.rel (%p323) target = $region48
      $region47: #{tpu_custom_call.1} parent=5 // pred_region
        // Predicated region
        $region49: #{tpu_custom_call.1} parent=47 // pred_check
          %p326 = pneg %p43
        $region50: #{tpu_custom_call.1} parent=47 // pred_check_branch
          %328 = sbr.rel (%p326) target = $region52
        $region51: #{tpu_custom_call.1} parent=47 // pred_region
          %s329 = sand.u32 %s33, 1
          %s330 = scalar_lea.sflag [#allocation3], %s329
          %s331 = sand.u32 %s33, 1
          %s332 = smul.addr %s331, 504
          %s333 = scalar_lea.vmem [#allocation2], %s332
          %s334 = smul.u32 63, %s23
          %s335 = ssub.s32 125, %s334
          %p336 = scmp.lt.s32.totalorder %s335, 63
          %s337 = scalar_select %p336, %s335, 63
          %s338 = smul.u32 128, %s337
          %s340 = ssub.s32 8064, %s338
          %341 = vsyncadd %s330, %s340
          %p342 = scmp.ne.s32.totalorder 0, %s338
          %s343 = smul.addr %s334, 128
          %s344 = scalar_lea.hbm %s0, %s343
          %s345 = smul.u32 8, %s337
          %s346 = sshll.u32 %s333, 4
          %s347 = int_to_ptr.vmem [resolvable:$true] %s346
          %s348 = sshll.u32 %s345, 4
          %352 = dma.hbm_to_vmem [thread:$0]  (%p342), %s344, %s348, %s347, %s330, 128, 128, 8
        $region52: #{tpu_custom_call.1} parent=47 // pred_fallthru
          _
      $region48: #{tpu_custom_call.1} parent=5 // pred_fallthru
        _
      %p353 = scmp.le.s32.totalorder 1, %s23
      %p354 = scmp.lt.s32.totalorder %s23, 3
      %p355 = pnand %p353, %p354
      %p356 = pneg %p355
      // Predicated region
      $region53: #{tpu_custom_call.1} parent=5 // pred_check
        _
      $region54: #{tpu_custom_call.1} parent=5 // pred_check_branch
        %358 = sbr.rel (%p355) target = $region56
      $region55: #{tpu_custom_call.1} parent=5 // pred_region
        %s359 = ssub.s32 %s23, 1
        %s360 = sand.u32 %s36, 1
        %s361 = scalar_lea.sflag [#allocation3], %s360
        %s362 = sand.u32 %s36, 1
        %s363 = smul.addr %s362, 504
        %s364 = scalar_lea.vmem [#allocation2], %s363
        // Predicated region
        $region57: #{tpu_custom_call.1} parent=55 // pred_check
          %p365 = pneg %p49
        $region58: #{tpu_custom_call.1} parent=55 // pred_check_branch
          %367 = sbr.rel (%p365) target = $region60
        $region59: #{tpu_custom_call.1} parent=55 // pred_region
          %368 = dma.done %s361, 8064
        $region60: #{tpu_custom_call.1} parent=55 // pred_fallthru
          _
        // Predicated region
        $region61: #{tpu_custom_call.1} parent=55 // pred_check
          %p369 = pneg %p70
        $region62: #{tpu_custom_call.1} parent=55 // pred_check_branch
          %371 = sbr.rel (%p369) target = $region64
        $region63: #{tpu_custom_call.1} parent=55 // pred_region
          %372 = dma.done [#allocation6], 1024
        $region64: #{tpu_custom_call.1} parent=55 // pred_fallthru
          _
        // Predicated region
        $region65: #{tpu_custom_call.1} parent=55 // pred_check
          %p373 = pneg %p112
        $region66: #{tpu_custom_call.1} parent=55 // pred_check_branch
          %375 = sbr.rel (%p373) target = $region68
        $region67: #{tpu_custom_call.1} parent=55 // pred_region
          %376 = dma.done [#allocation6], 1024
        $region68: #{tpu_custom_call.1} parent=55 // pred_fallthru
          _
        // Predicated region
        $region69: #{tpu_custom_call.1} parent=55 // pred_check
          %p377 = pneg %p154
        $region70: #{tpu_custom_call.1} parent=55 // pred_check_branch
          %379 = sbr.rel (%p377) target = $region72
        $region71: #{tpu_custom_call.1} parent=55 // pred_region
          %380 = dma.done [#allocation9], 1024
        $region72: #{tpu_custom_call.1} parent=55 // pred_fallthru
          _
        // Predicated region
        $region73: #{tpu_custom_call.1} parent=55 // pred_check
          %p381 = pneg %p196
        $region74: #{tpu_custom_call.1} parent=55 // pred_check_branch
          %383 = sbr.rel (%p381) target = $region76
        $region75: #{tpu_custom_call.1} parent=55 // pred_region
          %384 = dma.done [#allocation9], 1024
        $region76: #{tpu_custom_call.1} parent=55 // pred_fallthru
          _
        %s385 = sand.u32 %s36, 1
        %s386 = scalar_lea.sflag [#allocation3], %s385
        %s387 = sand.u32 %s36, 1
        %s388 = smul.addr %s387, 504
        %s389 = scalar_lea.vmem [#allocation2], %s388
        %p390 = pneg %p49
        %p391 = pneg %p46
        %p392 = pneg %p70
        %p393 = pneg %p67
        %p394 = pneg %p91
        %p395 = pneg %p88
        %p396 = pneg %p112
        %p397 = pneg %p109
        %p398 = pneg %p133
        %p399 = pneg %p130
        %p400 = pneg %p154
        %p401 = pneg %p151
        %p402 = pneg %p175
        %p403 = pneg %p172
        %p404 = pneg %p196
        %p405 = pneg %p193
        %p406 = pneg %p217
        %p407 = pneg %p214
        %p408 = pneg %p243
        %p409 = pneg %p240
        %s410 = sand.u32 %s230, 1
        %s411 = scalar_lea.sflag [#allocation4], %s410
        %s412 = sand.u32 %s230, 1
        %s413 = smul.addr %s412, 504
        %s414 = scalar_lea.vmem [#allocation11], %s413
        %s415 = smul.u32 63, %s28
        %s416 = ssub.s32 125, %s415
        %p417 = scmp.lt.s32.totalorder %s416, 63
        %s418 = scalar_select %p417, %s416, 63
        %s419 = smul.u32 128, %s418
        %s420 = smul.u32 63, %s28
        %s421 = ssub.s32 125, %s420
        %p422 = scmp.lt.s32.totalorder %s421, 63
        %s423 = scalar_select %p422, %s421, 63
        %s424 = smul.u32 128, %s423
        %v426 = vld [vmem:[%s364] sm:$0xff]
        %v427 = vld [vmem:[%s364 + $0x8] sm:$0xff]
        %v428 = vld [vmem:[%s364 + $0x10] sm:$0xff]
        %v429 = vld [vmem:[%s364 + $0x18] sm:$0xff]
        %v430 = vld [vmem:[%s364 + $0x20] sm:$0xff]
        %v431 = vld [vmem:[%s364 + $0x28] sm:$0xff]
        %v432 = vld [vmem:[%s364 + $0x30] sm:$0xff]
        %v433 = vld [vmem:[%s364 + $0x38] sm:$0xff]
        %v434 = vld [vmem:[%s364 + $0x40] sm:$0xff]
        %v435 = vld [vmem:[%s364 + $0x48] sm:$0xff]
        %v436 = vld [vmem:[%s364 + $0x50] sm:$0xff]
        %v437 = vld [vmem:[%s364 + $0x58] sm:$0xff]
        %v438 = vld [vmem:[%s364 + $0x60] sm:$0xff]
        %v439 = vld [vmem:[%s364 + $0x68] sm:$0xff]
        %v440 = vld [vmem:[%s364 + $0x70] sm:$0xff]
        %v441 = vld [vmem:[%s364 + $0x78] sm:$0xff]
        %v442 = vld [vmem:[%s364 + $0x80] sm:$0xff]
        %v443 = vld [vmem:[%s364 + $0x88] sm:$0xff]
        %v444 = vld [vmem:[%s364 + $0x90] sm:$0xff]
        %v445 = vld [vmem:[%s364 + $0x98] sm:$0xff]
        %v446 = vld [vmem:[%s364 + $0xa0] sm:$0xff]
        %v447 = vld [vmem:[%s364 + $0xa8] sm:$0xff]
        %v448 = vld [vmem:[%s364 + $0xb0] sm:$0xff]
        %v449 = vld [vmem:[%s364 + $0xb8] sm:$0xff]
        %v450 = vld [vmem:[%s364 + $0xc0] sm:$0xff]
        %v451 = vld [vmem:[%s364 + $0xc8] sm:$0xff]
        %v452 = vld [vmem:[%s364 + $0xd0] sm:$0xff]
        %v453 = vld [vmem:[%s364 + $0xd8] sm:$0xff]
        %v454 = vld [vmem:[%s364 + $0xe0] sm:$0xff]
        %v455 = vld [vmem:[%s364 + $0xe8] sm:$0xff]
        %v456 = vld [vmem:[%s364 + $0xf0] sm:$0xff]
        %v457 = vld [vmem:[%s364 + $0xf8] sm:$0xff]
        %v458 = vld [vmem:[%s364 + $0x100] sm:$0xff]
        %v459 = vld [vmem:[%s364 + $0x108] sm:$0xff]
        %v460 = vld [vmem:[%s364 + $0x110] sm:$0xff]
        %v461 = vld [vmem:[%s364 + $0x118] sm:$0xff]
        %v462 = vld [vmem:[%s364 + $0x120] sm:$0xff]
        %v463 = vld [vmem:[%s364 + $0x128] sm:$0xff]
        %v464 = vld [vmem:[%s364 + $0x130] sm:$0xff]
        %v465 = vld [vmem:[%s364 + $0x138] sm:$0xff]
        %v466 = vld [vmem:[%s364 + $0x140] sm:$0xff]
        %v467 = vld [vmem:[%s364 + $0x148] sm:$0xff]
        %v468 = vld [vmem:[%s364 + $0x150] sm:$0xff]
        %v469 = vld [vmem:[%s364 + $0x158] sm:$0xff]
        %v470 = vld [vmem:[%s364 + $0x160] sm:$0xff]
        %v471 = vld [vmem:[%s364 + $0x168] sm:$0xff]
        %v472 = vld [vmem:[%s364 + $0x170] sm:$0xff]
        %v473 = vld [vmem:[%s364 + $0x178] sm:$0xff]
        %v474 = vld [vmem:[%s364 + $0x180] sm:$0xff]
        %v475 = vld [vmem:[%s364 + $0x188] sm:$0xff]
        %v476 = vld [vmem:[%s364 + $0x190] sm:$0xff]
        %v477 = vld [vmem:[%s364 + $0x198] sm:$0xff]
        %v478 = vld [vmem:[%s364 + $0x1a0] sm:$0xff]
        %v479 = vld [vmem:[%s364 + $0x1a8] sm:$0xff]
        %v480 = vld [vmem:[%s364 + $0x1b0] sm:$0xff]
        %v481 = vld [vmem:[%s364 + $0x1b8] sm:$0xff]
        %v482 = vld [vmem:[%s364 + $0x1c0] sm:$0xff]
        %v483 = vld [vmem:[%s364 + $0x1c8] sm:$0xff]
        %v484 = vld [vmem:[%s364 + $0x1d0] sm:$0xff]
        %v485 = vld [vmem:[%s364 + $0x1d8] sm:$0xff]
        %v486 = vld [vmem:[%s364 + $0x1e0] sm:$0xff]
        %v487 = vld [vmem:[%s364 + $0x1e8] sm:$0xff]
        %v488 = vld [vmem:[%s364 + $0x1f0] sm:$0xff]
        %v489 = vpack.c.bf16 %v427, %v426
        %v490 = vpack.c.bf16 %v429, %v428
        %v491 = vpack.c.bf16 %v431, %v430
        %v492 = vpack.c.bf16 %v433, %v432
        %v493 = vpack.c.bf16 %v435, %v434
        %v494 = vpack.c.bf16 %v437, %v436
        %v495 = vpack.c.bf16 %v439, %v438
        %v496 = vpack.c.bf16 %v441, %v440
        %v497 = vpack.c.bf16 %v443, %v442
        %v498 = vpack.c.bf16 %v445, %v444
        %v499 = vpack.c.bf16 %v447, %v446
        %v500 = vpack.c.bf16 %v449, %v448
        %v501 = vpack.c.bf16 %v451, %v450
        %v502 = vpack.c.bf16 %v453, %v452
        %v503 = vpack.c.bf16 %v455, %v454
        %v504 = vpack.c.bf16 %v457, %v456
        %v505 = vpack.c.bf16 %v459, %v458
        %v506 = vpack.c.bf16 %v461, %v460
        %v507 = vpack.c.bf16 %v463, %v462
        %v508 = vpack.c.bf16 %v465, %v464
        %v509 = vpack.c.bf16 %v467, %v466
        %v510 = vpack.c.bf16 %v469, %v468
        %v511 = vpack.c.bf16 %v471, %v470
        %v512 = vpack.c.bf16 %v473, %v472
        %v513 = vpack.c.bf16 %v475, %v474
        %v514 = vpack.c.bf16 %v477, %v476
        %v515 = vpack.c.bf16 %v479, %v478
        %v516 = vpack.c.bf16 %v481, %v480
        %v517 = vpack.c.bf16 %v483, %v482
        %v518 = vpack.c.bf16 %v485, %v484
        %v519 = vpack.c.bf16 %v487, %v486
        %v520 = vpack.c.bf16 %v488, %v488
        %v521 = vld [vmem:[#allocation5] sm:$0xf]
        %v522 = vld [vmem:[#allocation5 + $0x4] sm:$0xf]
        %v523 = vld [vmem:[#allocation5 + $0x8] sm:$0xf]
        %v524 = vld [vmem:[#allocation5 + $0xc] sm:$0xf]
        %v525 = vld [vmem:[#allocation5 + $0x10] sm:$0xf]
        %v526 = vld [vmem:[#allocation5 + $0x14] sm:$0xf]
        %v527 = vld [vmem:[#allocation5 + $0x18] sm:$0xf]
        %v528 = vld [vmem:[#allocation5 + $0x1c] sm:$0xf]
        %v529 = vld [vmem:[#allocation5 + $0x20] sm:$0xf]
        %v530 = vld [vmem:[#allocation5 + $0x24] sm:$0xf]
        %v531 = vld [vmem:[#allocation5 + $0x28] sm:$0xf]
        %v532 = vld [vmem:[#allocation5 + $0x2c] sm:$0xf]
        %v533 = vld [vmem:[#allocation5 + $0x30] sm:$0xf]
        %v534 = vld [vmem:[#allocation5 + $0x34] sm:$0xf]
        %v535 = vld [vmem:[#allocation5 + $0x38] sm:$0xf]
        %v536 = vld [vmem:[#allocation5 + $0x3c] sm:$0xf]
        %v537 = vld [vmem:[%s2] sm:$0x1]
        %v539 = vlaneseq
        %v540 = vshrl.u32 %v539, 7
        %v541 = vsub.s32 0, %v540
        %v542 = vrot.slane %v537, %v541
        %v560 = vunpack.c.l.b16 %v521
        %v561 = vunpack.c.l.b16 %v522
        %v562 = vunpack.c.l.b16 %v523
        %v563 = vunpack.c.l.b16 %v524
        %v564 = vunpack.c.l.b16 %v525
        %v565 = vunpack.c.l.b16 %v526
        %v566 = vunpack.c.l.b16 %v527
        %v567 = vunpack.c.l.b16 %v528
        %v568 = vunpack.c.l.b16 %v529
        %v569 = vunpack.c.l.b16 %v530
        %v570 = vunpack.c.l.b16 %v531
        %v571 = vunpack.c.l.b16 %v532
        %v572 = vunpack.c.l.b16 %v533
        %v573 = vunpack.c.l.b16 %v534
        %v574 = vunpack.c.l.b16 %v535
        %v575 = vunpack.c.l.b16 %v536
        %v576 = vpack.c.b16 %v561, %v560
        %v577 = vpack.c.b16 %v563, %v562
        %v578 = vpack.c.b16 %v565, %v564
        %v579 = vpack.c.b16 %v567, %v566
        %v580 = vpack.c.b16 %v569, %v568
        %v581 = vpack.c.b16 %v571, %v570
        %v582 = vpack.c.b16 %v573, %v572
        %v583 = vpack.c.b16 %v575, %v574
        %592 = vmatprep.subr.bf16.mxu0 0
        %593 = vmatpush1.bf16.msra.mxu0 %v576
        %594 = vmatprep.subr.bf16.mxu0 0
        %595 = vmatpush1.bf16.msra.mxu0 %v577
        %596 = vmatprep.subr.bf16.mxu0 0
        %597 = vmatpush1.bf16.msra.mxu0 %v578
        %598 = vmatprep.subr.bf16.mxu0 0
        %599 = vmatpush1.bf16.msra.mxu0 %v579
        %600 = vmatprep.subr.bf16.mxu0 0
        %601 = vmatpush1.bf16.msra.mxu0 %v580
        %602 = vmatprep.subr.bf16.mxu0 0
        %603 = vmatpush1.bf16.msra.mxu0 %v581
        %604 = vmatprep.subr.bf16.mxu0 0
        %605 = vmatpush1.bf16.msra.mxu0 %v582
        %606 = vmatprep.subr.bf16.mxu0 0
        %607 = vmatpush1.bf16.msra.mxu0 %v583
        %608 = vmatprep.subr.bf16.mxu0 0
        %609 = vmatpush1.bf16.msra.mxu0 0
        %610 = vmatprep.subr.bf16.mxu0 0
        %611 = vmatpush1.bf16.msra.mxu0 0
        %612 = vmatprep.subr.bf16.mxu0 0
        %613 = vmatpush1.bf16.msra.mxu0 0
        %614 = vmatprep.subr.bf16.mxu0 0
        %615 = vmatpush1.bf16.msra.mxu0 0
        %616 = vmatprep.subr.bf16.mxu0 0
        %617 = vmatpush1.bf16.msra.mxu0 0
        %618 = vmatprep.subr.bf16.mxu0 0
        %619 = vmatpush1.bf16.msra.mxu0 0
        %620 = vmatprep.subr.bf16.mxu0 0
        %621 = vmatpush1.bf16.msra.mxu0 0
        %622 = vmatprep.subr.bf16.mxu0 0
        %623 = vmatpush1.bf16.msra.mxu0 0
        %624 = vmatprep.mubr.bf16.mxu0 0
        %625 = vmatmul.mubr.bf16.gmra.mrb[0].mxu0 %v489
        %v626 = vpop.f32.mrb[0].mxu0
        %v627 = vadd.f32 %v542, %v626
        %v628 = vpop.f32.mrb[0].mxu0
        %v629 = vpop.f32.mrb[0].mxu0
        %v630 = vadd.f32 %v542, %v629
        %v631 = vpop.f32.mrb[0].mxu0
        %632 = vmatprep.mubr.bf16.mxu0 0
        %633 = vmatmul.mubr.bf16.gmra.mrb[0].mxu0 %v490
        %v634 = vpop.f32.mrb[0].mxu0
        %v635 = vadd.f32 %v542, %v634
        %v636 = vpop.f32.mrb[0].mxu0
        %v637 = vpop.f32.mrb[0].mxu0
        %v638 = vadd.f32 %v542, %v637
        %v639 = vpop.f32.mrb[0].mxu0
        %640 = vmatprep.mubr.bf16.mxu0 0
        %641 = vmatmul.mubr.bf16.gmra.mrb[0].mxu0 %v491
        %v642 = vpop.f32.mrb[0].mxu0
        %v643 = vadd.f32 %v542, %v642
        %v644 = vpop.f32.mrb[0].mxu0
        %v645 = vpop.f32.mrb[0].mxu0
        %v646 = vadd.f32 %v542, %v645
        %v647 = vpop.f32.mrb[0].mxu0
        %648 = vmatprep.mubr.bf16.mxu0 0
        %649 = vmatmul.mubr.bf16.gmra.mrb[0].mxu0 %v492
        %v650 = vpop.f32.mrb[0].mxu0
        %v651 = vadd.f32 %v542, %v650
        %v652 = vpop.f32.mrb[0].mxu0
        %v653 = vpop.f32.mrb[0].mxu0
        %v654 = vadd.f32 %v542, %v653
        %v655 = vpop.f32.mrb[0].mxu0
        %656 = vmatprep.mubr.bf16.mxu0 0
        %657 = vmatmul.mubr.bf16.gmra.mrb[0].mxu0 %v493
        %v658 = vpop.f32.mrb[0].mxu0
        %v659 = vadd.f32 %v542, %v658
        %v660 = vpop.f32.mrb[0].mxu0
        %v661 = vpop.f32.mrb[0].mxu0
        %v662 = vadd.f32 %v542, %v661
        %v663 = vpop.f32.mrb[0].mxu0
        %664 = vmatprep.mubr.bf16.mxu0 0
        %665 = vmatmul.mubr.bf16.gmra.mrb[0].mxu0 %v494
        %v666 = vpop.f32.mrb[0].mxu0
        %v667 = vadd.f32 %v542, %v666
        %v668 = vpop.f32.mrb[0].mxu0
        %v669 = vpop.f32.mrb[0].mxu0
        %v670 = vadd.f32 %v542, %v669
        %v671 = vpop.f32.mrb[0].mxu0
        %672 = vmatprep.mubr.bf16.mxu0 0
        %673 = vmatmul.mubr.bf16.gmra.mrb[0].mxu0 %v495
        %v674 = vpop.f32.mrb[0].mxu0
        %v675 = vadd.f32 %v542, %v674
        %v676 = vpop.f32.mrb[0].mxu0
        %v677 = vpop.f32.mrb[0].mxu0
        %v678 = vadd.f32 %v542, %v677
        %v679 = vpop.f32.mrb[0].mxu0
        %680 = vmatprep.mubr.bf16.mxu0 0
        %681 = vmatmul.mubr.bf16.gmra.mrb[0].mxu0 %v496
        %v682 = vpop.f32.mrb[0].mxu0
        %v683 = vadd.f32 %v542, %v682
        %v684 = vpop.f32.mrb[0].mxu0
        %v685 = vpop.f32.mrb[0].mxu0
        %v686 = vadd.f32 %v542, %v685
        %v687 = vpop.f32.mrb[0].mxu0
        %688 = vmatprep.mubr.bf16.mxu0 0
        %689 = vmatmul.mubr.bf16.gmra.mrb[0].mxu0 %v497
        %v690 = vpop.f32.mrb[0].mxu0
        %v691 = vadd.f32 %v542, %v690
        %v692 = vpop.f32.mrb[0].mxu0
        %v693 = vpop.f32.mrb[0].mxu0
        %v694 = vadd.f32 %v542, %v693
        %v695 = vpop.f32.mrb[0].mxu0
        %696 = vmatprep.mubr.bf16.mxu0 0
        %697 = vmatmul.mubr.bf16.gmra.mrb[0].mxu0 %v498
        %v698 = vpop.f32.mrb[0].mxu0
        %v699 = vadd.f32 %v542, %v698
        %v700 = vpop.f32.mrb[0].mxu0
        %v701 = vpop.f32.mrb[0].mxu0
        %v702 = vadd.f32 %v542, %v701
        %v703 = vpop.f32.mrb[0].mxu0
        %704 = vmatprep.mubr.bf16.mxu0 0
        %705 = vmatmul.mubr.bf16.gmra.mrb[0].mxu0 %v499
        %v706 = vpop.f32.mrb[0].mxu0
        %v707 = vadd.f32 %v542, %v706
        %v708 = vpop.f32.mrb[0].mxu0
        %v709 = vpop.f32.mrb[0].mxu0
        %v710 = vadd.f32 %v542, %v709
        %v711 = vpop.f32.mrb[0].mxu0
        %712 = vmatprep.mubr.bf16.mxu0 0
        %713 = vmatmul.mubr.bf16.gmra.mrb[0].mxu0 %v500
        %v714 = vpop.f32.mrb[0].mxu0
        %v715 = vadd.f32 %v542, %v714
        %v716 = vpop.f32.mrb[0].mxu0
        %v717 = vpop.f32.mrb[0].mxu0
        %v718 = vadd.f32 %v542, %v717
        %v719 = vpop.f32.mrb[0].mxu0
        %720 = vmatprep.mubr.bf16.mxu0 0
        %721 = vmatmul.mubr.bf16.gmra.mrb[0].mxu0 %v501
        %v722 = vpop.f32.mrb[0].mxu0
        %v723 = vadd.f32 %v542, %v722
        %v724 = vpop.f32.mrb[0].mxu0
        %v725 = vpop.f32.mrb[0].mxu0
        %v726 = vadd.f32 %v542, %v725
        %v727 = vpop.f32.mrb[0].mxu0
        %728 = vmatprep.mubr.bf16.mxu0 0
        %729 = vmatmul.mubr.bf16.gmra.mrb[0].mxu0 %v502
        %v730 = vpop.f32.mrb[0].mxu0
        %v731 = vadd.f32 %v542, %v730
        %v732 = vpop.f32.mrb[0].mxu0
        %v733 = vpop.f32.mrb[0].mxu0
        %v734 = vadd.f32 %v542, %v733
        %v735 = vpop.f32.mrb[0].mxu0
        %736 = vmatprep.mubr.bf16.mxu0 0
        %737 = vmatmul.mubr.bf16.gmra.mrb[0].mxu0 %v503
        %v738 = vpop.f32.mrb[0].mxu0
        %v739 = vadd.f32 %v542, %v738
        %v740 = vpop.f32.mrb[0].mxu0
        %v741 = vpop.f32.mrb[0].mxu0
        %v742 = vadd.f32 %v542, %v741
        %v743 = vpop.f32.mrb[0].mxu0
        %744 = vmatprep.mubr.bf16.mxu0 0
        %745 = vmatmul.mubr.bf16.gmra.mrb[0].mxu0 %v504
        %v746 = vpop.f32.mrb[0].mxu0
        %v747 = vadd.f32 %v542, %v746
        %v748 = vpop.f32.mrb[0].mxu0
        %v749 = vpop.f32.mrb[0].mxu0
        %v750 = vadd.f32 %v542, %v749
        %v751 = vpop.f32.mrb[0].mxu0
        %752 = vmatprep.mubr.bf16.mxu0 0
        %753 = vmatmul.mubr.bf16.gmra.mrb[0].mxu0 %v505
        %v754 = vpop.f32.mrb[0].mxu0
        %v755 = vadd.f32 %v542, %v754
        %v756 = vpop.f32.mrb[0].mxu0
        %v757 = vpop.f32.mrb[0].mxu0
        %v758 = vadd.f32 %v542, %v757
        %v759 = vpop.f32.mrb[0].mxu0
        %760 = vmatprep.mubr.bf16.mxu0 0
        %761 = vmatmul.mubr.bf16.gmra.mrb[0].mxu0 %v506
        %v762 = vpop.f32.mrb[0].mxu0
        %v763 = vadd.f32 %v542, %v762
        %v764 = vpop.f32.mrb[0].mxu0
        %v765 = vpop.f32.mrb[0].mxu0
        %v766 = vadd.f32 %v542, %v765
        %v767 = vpop.f32.mrb[0].mxu0
        %768 = vmatprep.mubr.bf16.mxu0 0
        %769 = vmatmul.mubr.bf16.gmra.mrb[0].mxu0 %v507
        %v770 = vpop.f32.mrb[0].mxu0
        %v771 = vadd.f32 %v542, %v770
        %v772 = vpop.f32.mrb[0].mxu0
        %v773 = vpop.f32.mrb[0].mxu0
        %v774 = vadd.f32 %v542, %v773
        %v775 = vpop.f32.mrb[0].mxu0
        %776 = vmatprep.mubr.bf16.mxu0 0
        %777 = vmatmul.mubr.bf16.gmra.mrb[0].mxu0 %v508
        %v778 = vpop.f32.mrb[0].mxu0
        %v779 = vadd.f32 %v542, %v778
        %v780 = vpop.f32.mrb[0].mxu0
        %v781 = vpop.f32.mrb[0].mxu0
        %v782 = vadd.f32 %v542, %v781
        %v783 = vpop.f32.mrb[0].mxu0
        %784 = vmatprep.mubr.bf16.mxu0 0
        %785 = vmatmul.mubr.bf16.gmra.mrb[0].mxu0 %v509
        %v786 = vpop.f32.mrb[0].mxu0
        %v787 = vadd.f32 %v542, %v786
        %v788 = vpop.f32.mrb[0].mxu0
        %v789 = vpop.f32.mrb[0].mxu0
        %v790 = vadd.f32 %v542, %v789
        %v791 = vpop.f32.mrb[0].mxu0
        %792 = vmatprep.mubr.bf16.mxu0 0
        %793 = vmatmul.mubr.bf16.gmra.mrb[0].mxu0 %v510
        %v794 = vpop.f32.mrb[0].mxu0
        %v795 = vadd.f32 %v542, %v794
        %v796 = vpop.f32.mrb[0].mxu0
        %v797 = vpop.f32.mrb[0].mxu0
        %v798 = vadd.f32 %v542, %v797
        %v799 = vpop.f32.mrb[0].mxu0
        %800 = vmatprep.mubr.bf16.mxu0 0
        %801 = vmatmul.mubr.bf16.gmra.mrb[0].mxu0 %v511
        %v802 = vpop.f32.mrb[0].mxu0
        %v803 = vadd.f32 %v542, %v802
        %v804 = vpop.f32.mrb[0].mxu0
        %v805 = vpop.f32.mrb[0].mxu0
        %v806 = vadd.f32 %v542, %v805
        %v807 = vpop.f32.mrb[0].mxu0
        %808 = vmatprep.mubr.bf16.mxu0 0
        %809 = vmatmul.mubr.bf16.gmra.mrb[0].mxu0 %v512
        %v810 = vpop.f32.mrb[0].mxu0
        %v811 = vadd.f32 %v542, %v810
        %v812 = vpop.f32.mrb[0].mxu0
        %v813 = vpop.f32.mrb[0].mxu0
        %v814 = vadd.f32 %v542, %v813
        %v815 = vpop.f32.mrb[0].mxu0
        %816 = vmatprep.mubr.bf16.mxu0 0
        %817 = vmatmul.mubr.bf16.gmra.mrb[0].mxu0 %v513
        %v818 = vpop.f32.mrb[0].mxu0
        %v819 = vadd.f32 %v542, %v818
        %v820 = vpop.f32.mrb[0].mxu0
        %v821 = vpop.f32.mrb[0].mxu0
        %v822 = vadd.f32 %v542, %v821
        %v823 = vpop.f32.mrb[0].mxu0
        %824 = vmatprep.mubr.bf16.mxu0 0
        %825 = vmatmul.mubr.bf16.gmra.mrb[0].mxu0 %v514
        %v826 = vpop.f32.mrb[0].mxu0
        %v827 = vadd.f32 %v542, %v826
        %v828 = vpop.f32.mrb[0].mxu0
        %v829 = vpop.f32.mrb[0].mxu0
        %v830 = vadd.f32 %v542, %v829
        %v831 = vpop.f32.mrb[0].mxu0
        %832 = vmatprep.mubr.bf16.mxu0 0
        %833 = vmatmul.mubr.bf16.gmra.mrb[0].mxu0 %v515
        %v834 = vpop.f32.mrb[0].mxu0
        %v835 = vadd.f32 %v542, %v834
        %v836 = vpop.f32.mrb[0].mxu0
        %v837 = vpop.f32.mrb[0].mxu0
        %v838 = vadd.f32 %v542, %v837
        %v839 = vpop.f32.mrb[0].mxu0
        %840 = vmatprep.mubr.bf16.mxu0 0
        %841 = vmatmul.mubr.bf16.gmra.mrb[0].mxu0 %v516
        %v842 = vpop.f32.mrb[0].mxu0
        %v843 = vadd.f32 %v542, %v842
        %v844 = vpop.f32.mrb[0].mxu0
        %v845 = vpop.f32.mrb[0].mxu0
        %v846 = vadd.f32 %v542, %v845
        %v847 = vpop.f32.mrb[0].mxu0
        %848 = vmatprep.mubr.bf16.mxu0 0
        %849 = vmatmul.mubr.bf16.gmra.mrb[0].mxu0 %v517
        %v850 = vpop.f32.mrb[0].mxu0
        %v851 = vadd.f32 %v542, %v850
        %v852 = vpop.f32.mrb[0].mxu0
        %v853 = vpop.f32.mrb[0].mxu0
        %v854 = vadd.f32 %v542, %v853
        %v855 = vpop.f32.mrb[0].mxu0
        %856 = vmatprep.mubr.bf16.mxu0 0
        %857 = vmatmul.mubr.bf16.gmra.mrb[0].mxu0 %v518
        %v858 = vpop.f32.mrb[0].mxu0
        %v859 = vadd.f32 %v542, %v858
        %v860 = vpop.f32.mrb[0].mxu0
        %v861 = vpop.f32.mrb[0].mxu0
        %v862 = vadd.f32 %v542, %v861
        %v863 = vpop.f32.mrb[0].mxu0
        %864 = vmatprep.mubr.bf16.mxu0 0
        %865 = vmatmul.mubr.bf16.gmra.mrb[0].mxu0 %v519
        %v866 = vpop.f32.mrb[0].mxu0
        %v867 = vadd.f32 %v542, %v866
        %v868 = vpop.f32.mrb[0].mxu0
        %v869 = vpop.f32.mrb[0].mxu0
        %v870 = vadd.f32 %v542, %v869
        %v871 = vpop.f32.mrb[0].mxu0
        %872 = vmatprep.mubr.bf16.mxu0 0
        %873 = vmatmul.mubr.bf16.gmra.mrb[0].mxu0 %v520
        %v874 = vpop.f32.mrb[0].mxu0
        %v875 = vadd.f32 %v542, %v874
        %v876 = vpop.f32.mrb[0].mxu0
        %v877 = vpop.f32.mrb[0].mxu0
        %v878 = vpop.f32.mrb[0].mxu0
        %879 = vdwg.mxu0
        %v880 = vmax.f32 %v627, 0.0
        %v881 = vmax.f32 %v630, 0.0
        %v882 = vmax.f32 %v635, 0.0
        %v883 = vmax.f32 %v638, 0.0
        %v884 = vmax.f32 %v643, 0.0
        %v885 = vmax.f32 %v646, 0.0
        %v886 = vmax.f32 %v651, 0.0
        %v887 = vmax.f32 %v654, 0.0
        %v888 = vmax.f32 %v659, 0.0
        %v889 = vmax.f32 %v662, 0.0
        %v890 = vmax.f32 %v667, 0.0
        %v891 = vmax.f32 %v670, 0.0
        %v892 = vmax.f32 %v675, 0.0
        %v893 = vmax.f32 %v678, 0.0
        %v894 = vmax.f32 %v683, 0.0
        %v895 = vmax.f32 %v686, 0.0
        %v896 = vmax.f32 %v691, 0.0
        %v897 = vmax.f32 %v694, 0.0
        %v898 = vmax.f32 %v699, 0.0
        %v899 = vmax.f32 %v702, 0.0
        %v900 = vmax.f32 %v707, 0.0
        %v901 = vmax.f32 %v710, 0.0
        %v902 = vmax.f32 %v715, 0.0
        %v903 = vmax.f32 %v718, 0.0
        %v904 = vmax.f32 %v723, 0.0
        %v905 = vmax.f32 %v726, 0.0
        %v906 = vmax.f32 %v731, 0.0
        %v907 = vmax.f32 %v734, 0.0
        %v908 = vmax.f32 %v739, 0.0
        %v909 = vmax.f32 %v742, 0.0
        %v910 = vmax.f32 %v747, 0.0
        %v911 = vmax.f32 %v750, 0.0
        %v912 = vmax.f32 %v755, 0.0
        %v913 = vmax.f32 %v758, 0.0
        %v914 = vmax.f32 %v763, 0.0
        %v915 = vmax.f32 %v766, 0.0
        %v916 = vmax.f32 %v771, 0.0
        %v917 = vmax.f32 %v774, 0.0
        %v918 = vmax.f32 %v779, 0.0
        %v919 = vmax.f32 %v782, 0.0
        %v920 = vmax.f32 %v787, 0.0
        %v921 = vmax.f32 %v790, 0.0
        %v922 = vmax.f32 %v795, 0.0
        %v923 = vmax.f32 %v798, 0.0
        %v924 = vmax.f32 %v803, 0.0
        %v925 = vmax.f32 %v806, 0.0
        %v926 = vmax.f32 %v811, 0.0
        %v927 = vmax.f32 %v814, 0.0
        %v928 = vmax.f32 %v819, 0.0
        %v929 = vmax.f32 %v822, 0.0
        %v930 = vmax.f32 %v827, 0.0
        %v931 = vmax.f32 %v830, 0.0
        %v932 = vmax.f32 %v835, 0.0
        %v933 = vmax.f32 %v838, 0.0
        %v934 = vmax.f32 %v843, 0.0
        %v935 = vmax.f32 %v846, 0.0
        %v936 = vmax.f32 %v851, 0.0
        %v937 = vmax.f32 %v854, 0.0
        %v938 = vmax.f32 %v859, 0.0
        %v939 = vmax.f32 %v862, 0.0
        %v940 = vmax.f32 %v867, 0.0
        %v941 = vmax.f32 %v870, 0.0
        %v942 = vmax.f32 %v875, 0.0
        %v943 = vpack.c.bf16 %v881, %v880
        %v944 = vpack.c.bf16 %v883, %v882
        %v945 = vpack.c.bf16 %v885, %v884
        %v946 = vpack.c.bf16 %v887, %v886
        %v947 = vpack.c.bf16 %v889, %v888
        %v948 = vpack.c.bf16 %v891, %v890
        %v949 = vpack.c.bf16 %v893, %v892
        %v950 = vpack.c.bf16 %v895, %v894
        %v951 = vpack.c.bf16 %v897, %v896
        %v952 = vpack.c.bf16 %v899, %v898
        %v953 = vpack.c.bf16 %v901, %v900
        %v954 = vpack.c.bf16 %v903, %v902
        %v955 = vpack.c.bf16 %v905, %v904
        %v956 = vpack.c.bf16 %v907, %v906
        %v957 = vpack.c.bf16 %v909, %v908
        %v958 = vpack.c.bf16 %v911, %v910
        %v959 = vpack.c.bf16 %v913, %v912
        %v960 = vpack.c.bf16 %v915, %v914
        %v961 = vpack.c.bf16 %v917, %v916
        %v962 = vpack.c.bf16 %v919, %v918
        %v963 = vpack.c.bf16 %v921, %v920
        %v964 = vpack.c.bf16 %v923, %v922
        %v965 = vpack.c.bf16 %v925, %v924
        %v966 = vpack.c.bf16 %v927, %v926
        %v967 = vpack.c.bf16 %v929, %v928
        %v968 = vpack.c.bf16 %v931, %v930
        %v969 = vpack.c.bf16 %v933, %v932
        %v970 = vpack.c.bf16 %v935, %v934
        %v971 = vpack.c.bf16 %v937, %v936
        %v972 = vpack.c.bf16 %v939, %v938
        %v973 = vpack.c.bf16 %v941, %v940
        %v974 = vpack.c.bf16 %v942, %v942
        %v975 = vld [vmem:[#allocation7] sm:$0xf]
        %v976 = vld [vmem:[#allocation7 + $0x4] sm:$0xf]
        %v977 = vld [vmem:[#allocation7 + $0x8] sm:$0xf]
        %v978 = vld [vmem:[#allocation7 + $0xc] sm:$0xf]
        %v979 = vld [vmem:[#allocation7 + $0x10] sm:$0xf]
        %v980 = vld [vmem:[#allocation7 + $0x14] sm:$0xf]
        %v981 = vld [vmem:[#allocation7 + $0x18] sm:$0xf]
        %v982 = vld [vmem:[#allocation7 + $0x1c] sm:$0xf]
        %v983 = vld [vmem:[#allocation7 + $0x20] sm:$0xf]
        %v984 = vld [vmem:[#allocation7 + $0x24] sm:$0xf]
        %v985 = vld [vmem:[#allocation7 + $0x28] sm:$0xf]
        %v986 = vld [vmem:[#allocation7 + $0x2c] sm:$0xf]
        %v987 = vld [vmem:[#allocation7 + $0x30] sm:$0xf]
        %v988 = vld [vmem:[#allocation7 + $0x34] sm:$0xf]
        %v989 = vld [vmem:[#allocation7 + $0x38] sm:$0xf]
        %v990 = vld [vmem:[#allocation7 + $0x3c] sm:$0xf]
        %v991 = vld [vmem:[%s4] sm:$0x1]
        %v993 = vlaneseq
        %v994 = vshrl.u32 %v993, 7
        %v995 = vsub.s32 0, %v994
        %v996 = vrot.slane %v991, %v995
        %v1014 = vunpack.c.l.b16 %v975
        %v1015 = vunpack.c.l.b16 %v976
        %v1016 = vunpack.c.l.b16 %v977
        %v1017 = vunpack.c.l.b16 %v978
        %v1018 = vunpack.c.l.b16 %v979
        %v1019 = vunpack.c.l.b16 %v980
        %v1020 = vunpack.c.l.b16 %v981
        %v1021 = vunpack.c.l.b16 %v982
        %v1022 = vunpack.c.l.b16 %v983
        %v1023 = vunpack.c.l.b16 %v984
        %v1024 = vunpack.c.l.b16 %v985
        %v1025 = vunpack.c.l.b16 %v986
        %v1026 = vunpack.c.l.b16 %v987
        %v1027 = vunpack.c.l.b16 %v988
        %v1028 = vunpack.c.l.b16 %v989
        %v1029 = vunpack.c.l.b16 %v990
        %v1030 = vpack.c.b16 %v1015, %v1014
        %v1031 = vpack.c.b16 %v1017, %v1016
        %v1032 = vpack.c.b16 %v1019, %v1018
        %v1033 = vpack.c.b16 %v1021, %v1020
        %v1034 = vpack.c.b16 %v1023, %v1022
        %v1035 = vpack.c.b16 %v1025, %v1024
        %v1036 = vpack.c.b16 %v1027, %v1026
        %v1037 = vpack.c.b16 %v1029, %v1028
        %1046 = vmatprep.subr.bf16.mxu0 0
        %1047 = vmatpush1.bf16.msra.mxu0 %v1030
        %1048 = vmatprep.subr.bf16.mxu0 0
        %1049 = vmatpush1.bf16.msra.mxu0 %v1031
        %1050 = vmatprep.subr.bf16.mxu0 0
        %1051 = vmatpush1.bf16.msra.mxu0 %v1032
        %1052 = vmatprep.subr.bf16.mxu0 0
        %1053 = vmatpush1.bf16.msra.mxu0 %v1033
        %1054 = vmatprep.subr.bf16.mxu0 0
        %1055 = vmatpush1.bf16.msra.mxu0 %v1034
        %1056 = vmatprep.subr.bf16.mxu0 0
        %1057 = vmatpush1.bf16.msra.mxu0 %v1035
        %1058 = vmatprep.subr.bf16.mxu0 0
        %1059 = vmatpush1.bf16.msra.mxu0 %v1036
        %1060 = vmatprep.subr.bf16.mxu0 0
        %1061 = vmatpush1.bf16.msra.mxu0 %v1037
        %1062 = vmatprep.subr.bf16.mxu0 0
        %1063 = vmatpush1.bf16.msra.mxu0 0
        %1064 = vmatprep.subr.bf16.mxu0 0
        %1065 = vmatpush1.bf16.msra.mxu0 0
        %1066 = vmatprep.subr.bf16.mxu0 0
        %1067 = vmatpush1.bf16.msra.mxu0 0
        %1068 = vmatprep.subr.bf16.mxu0 0
        %1069 = vmatpush1.bf16.msra.mxu0 0
        %1070 = vmatprep.subr.bf16.mxu0 0
        %1071 = vmatpush1.bf16.msra.mxu0 0
        %1072 = vmatprep.subr.bf16.mxu0 0
        %1073 = vmatpush1.bf16.msra.mxu0 0
        %1074 = vmatprep.subr.bf16.mxu0 0
        %1075 = vmatpush1.bf16.msra.mxu0 0
        %1076 = vmatprep.subr.bf16.mxu0 0
        %1077 = vmatpush1.bf16.msra.mxu0 0
        %1078 = vmatprep.mubr.bf16.mxu0 0
        %1079 = vmatmul.mubr.bf16.gmra.mrb[0].mxu0 %v943
        %v1080 = vpop.f32.mrb[0].mxu0
        %v1081 = vadd.f32 %v996, %v1080
        %v1082 = vpop.f32.mrb[0].mxu0
        %v1083 = vpop.f32.mrb[0].mxu0
        %v1084 = vadd.f32 %v996, %v1083
        %v1085 = vpop.f32.mrb[0].mxu0
        %1086 = vmatprep.mubr.bf16.mxu0 0
        %1087 = vmatmul.mubr.bf16.gmra.mrb[0].mxu0 %v944
        %v1088 = vpop.f32.mrb[0].mxu0
        %v1089 = vadd.f32 %v996, %v1088
        %v1090 = vpop.f32.mrb[0].mxu0
        %v1091 = vpop.f32.mrb[0].mxu0
        %v1092 = vadd.f32 %v996, %v1091
        %v1093 = vpop.f32.mrb[0].mxu0
        %1094 = vmatprep.mubr.bf16.mxu0 0
        %1095 = vmatmul.mubr.bf16.gmra.mrb[0].mxu0 %v945
        %v1096 = vpop.f32.mrb[0].mxu0
        %v1097 = vadd.f32 %v996, %v1096
        %v1098 = vpop.f32.mrb[0].mxu0
        %v1099 = vpop.f32.mrb[0].mxu0
        %v1100 = vadd.f32 %v996, %v1099
        %v1101 = vpop.f32.mrb[0].mxu0
        %1102 = vmatprep.mubr.bf16.mxu0 0
        %1103 = vmatmul.mubr.bf16.gmra.mrb[0].mxu0 %v946
        %v1104 = vpop.f32.mrb[0].mxu0
        %v1105 = vadd.f32 %v996, %v1104
        %v1106 = vpop.f32.mrb[0].mxu0
        %v1107 = vpop.f32.mrb[0].mxu0
        %v1108 = vadd.f32 %v996, %v1107
        %v1109 = vpop.f32.mrb[0].mxu0
        %1110 = vmatprep.mubr.bf16.mxu0 0
        %1111 = vmatmul.mubr.bf16.gmra.mrb[0].mxu0 %v947
        %v1112 = vpop.f32.mrb[0].mxu0
        %v1113 = vadd.f32 %v996, %v1112
        %v1114 = vpop.f32.mrb[0].mxu0
        %v1115 = vpop.f32.mrb[0].mxu0
        %v1116 = vadd.f32 %v996, %v1115
        %v1117 = vpop.f32.mrb[0].mxu0
        %1118 = vmatprep.mubr.bf16.mxu0 0
        %1119 = vmatmul.mubr.bf16.gmra.mrb[0].mxu0 %v948
        %v1120 = vpop.f32.mrb[0].mxu0
        %v1121 = vadd.f32 %v996, %v1120
        %v1122 = vpop.f32.mrb[0].mxu0
        %v1123 = vpop.f32.mrb[0].mxu0
        %v1124 = vadd.f32 %v996, %v1123
        %v1125 = vpop.f32.mrb[0].mxu0
        %1126 = vmatprep.mubr.bf16.mxu0 0
        %1127 = vmatmul.mubr.bf16.gmra.mrb[0].mxu0 %v949
        %v1128 = vpop.f32.mrb[0].mxu0
        %v1129 = vadd.f32 %v996, %v1128
        %v1130 = vpop.f32.mrb[0].mxu0
        %v1131 = vpop.f32.mrb[0].mxu0
        %v1132 = vadd.f32 %v996, %v1131
        %v1133 = vpop.f32.mrb[0].mxu0
        %1134 = vmatprep.mubr.bf16.mxu0 0
        %1135 = vmatmul.mubr.bf16.gmra.mrb[0].mxu0 %v950
        %v1136 = vpop.f32.mrb[0].mxu0
        %v1137 = vadd.f32 %v996, %v1136
        %v1138 = vpop.f32.mrb[0].mxu0
        %v1139 = vpop.f32.mrb[0].mxu0
        %v1140 = vadd.f32 %v996, %v1139
        %v1141 = vpop.f32.mrb[0].mxu0
        %1142 = vmatprep.mubr.bf16.mxu0 0
        %1143 = vmatmul.mubr.bf16.gmra.mrb[0].mxu0 %v951
        %v1144 = vpop.f32.mrb[0].mxu0
        %v1145 = vadd.f32 %v996, %v1144
        %v1146 = vpop.f32.mrb[0].mxu0
        %v1147 = vpop.f32.mrb[0].mxu0
        %v1148 = vadd.f32 %v996, %v1147
        %v1149 = vpop.f32.mrb[0].mxu0
        %1150 = vmatprep.mubr.bf16.mxu0 0
        %1151 = vmatmul.mubr.bf16.gmra.mrb[0].mxu0 %v952
        %v1152 = vpop.f32.mrb[0].mxu0
        %v1153 = vadd.f32 %v996, %v1152
        %v1154 = vpop.f32.mrb[0].mxu0
        %v1155 = vpop.f32.mrb[0].mxu0
        %v1156 = vadd.f32 %v996, %v1155
        %v1157 = vpop.f32.mrb[0].mxu0
        %1158 = vmatprep.mubr.bf16.mxu0 0
        %1159 = vmatmul.mubr.bf16.gmra.mrb[0].mxu0 %v953
        %v1160 = vpop.f32.mrb[0].mxu0
        %v1161 = vadd.f32 %v996, %v1160
        %v1162 = vpop.f32.mrb[0].mxu0
        %v1163 = vpop.f32.mrb[0].mxu0
        %v1164 = vadd.f32 %v996, %v1163
        %v1165 = vpop.f32.mrb[0].mxu0
        %1166 = vmatprep.mubr.bf16.mxu0 0
        %1167 = vmatmul.mubr.bf16.gmra.mrb[0].mxu0 %v954
        %v1168 = vpop.f32.mrb[0].mxu0
        %v1169 = vadd.f32 %v996, %v1168
        %v1170 = vpop.f32.mrb[0].mxu0
        %v1171 = vpop.f32.mrb[0].mxu0
        %v1172 = vadd.f32 %v996, %v1171
        %v1173 = vpop.f32.mrb[0].mxu0
        %1174 = vmatprep.mubr.bf16.mxu0 0
        %1175 = vmatmul.mubr.bf16.gmra.mrb[0].mxu0 %v955
        %v1176 = vpop.f32.mrb[0].mxu0
        %v1177 = vadd.f32 %v996, %v1176
        %v1178 = vpop.f32.mrb[0].mxu0
        %v1179 = vpop.f32.mrb[0].mxu0
        %v1180 = vadd.f32 %v996, %v1179
        %v1181 = vpop.f32.mrb[0].mxu0
        %1182 = vmatprep.mubr.bf16.mxu0 0
        %1183 = vmatmul.mubr.bf16.gmra.mrb[0].mxu0 %v956
        %v1184 = vpop.f32.mrb[0].mxu0
        %v1185 = vadd.f32 %v996, %v1184
        %v1186 = vpop.f32.mrb[0].mxu0
        %v1187 = vpop.f32.mrb[0].mxu0
        %v1188 = vadd.f32 %v996, %v1187
        %v1189 = vpop.f32.mrb[0].mxu0
        %1190 = vmatprep.mubr.bf16.mxu0 0
        %1191 = vmatmul.mubr.bf16.gmra.mrb[0].mxu0 %v957
        %v1192 = vpop.f32.mrb[0].mxu0
        %v1193 = vadd.f32 %v996, %v1192
        %v1194 = vpop.f32.mrb[0].mxu0
        %v1195 = vpop.f32.mrb[0].mxu0
        %v1196 = vadd.f32 %v996, %v1195
        %v1197 = vpop.f32.mrb[0].mxu0
        %1198 = vmatprep.mubr.bf16.mxu0 0
        %1199 = vmatmul.mubr.bf16.gmra.mrb[0].mxu0 %v958
        %v1200 = vpop.f32.mrb[0].mxu0
        %v1201 = vadd.f32 %v996, %v1200
        %v1202 = vpop.f32.mrb[0].mxu0
        %v1203 = vpop.f32.mrb[0].mxu0
        %v1204 = vadd.f32 %v996, %v1203
        %v1205 = vpop.f32.mrb[0].mxu0
        %1206 = vmatprep.mubr.bf16.mxu0 0
        %1207 = vmatmul.mubr.bf16.gmra.mrb[0].mxu0 %v959
        %v1208 = vpop.f32.mrb[0].mxu0
        %v1209 = vadd.f32 %v996, %v1208
        %v1210 = vpop.f32.mrb[0].mxu0
        %v1211 = vpop.f32.mrb[0].mxu0
        %v1212 = vadd.f32 %v996, %v1211
        %v1213 = vpop.f32.mrb[0].mxu0
        %1214 = vmatprep.mubr.bf16.mxu0 0
        %1215 = vmatmul.mubr.bf16.gmra.mrb[0].mxu0 %v960
        %v1216 = vpop.f32.mrb[0].mxu0
        %v1217 = vadd.f32 %v996, %v1216
        %v1218 = vpop.f32.mrb[0].mxu0
        %v1219 = vpop.f32.mrb[0].mxu0
        %v1220 = vadd.f32 %v996, %v1219
        %v1221 = vpop.f32.mrb[0].mxu0
        %1222 = vmatprep.mubr.bf16.mxu0 0
        %1223 = vmatmul.mubr.bf16.gmra.mrb[0].mxu0 %v961
        %v1224 = vpop.f32.mrb[0].mxu0
        %v1225 = vadd.f32 %v996, %v1224
        %v1226 = vpop.f32.mrb[0].mxu0
        %v1227 = vpop.f32.mrb[0].mxu0
        %v1228 = vadd.f32 %v996, %v1227
        %v1229 = vpop.f32.mrb[0].mxu0
        %1230 = vmatprep.mubr.bf16.mxu0 0
        %1231 = vmatmul.mubr.bf16.gmra.mrb[0].mxu0 %v962
        %v1232 = vpop.f32.mrb[0].mxu0
        %v1233 = vadd.f32 %v996, %v1232
        %v1234 = vpop.f32.mrb[0].mxu0
        %v1235 = vpop.f32.mrb[0].mxu0
        %v1236 = vadd.f32 %v996, %v1235
        %v1237 = vpop.f32.mrb[0].mxu0
        %1238 = vmatprep.mubr.bf16.mxu0 0
        %1239 = vmatmul.mubr.bf16.gmra.mrb[0].mxu0 %v963
        %v1240 = vpop.f32.mrb[0].mxu0
        %v1241 = vadd.f32 %v996, %v1240
        %v1242 = vpop.f32.mrb[0].mxu0
        %v1243 = vpop.f32.mrb[0].mxu0
        %v1244 = vadd.f32 %v996, %v1243
        %v1245 = vpop.f32.mrb[0].mxu0
        %1246 = vmatprep.mubr.bf16.mxu0 0
        %1247 = vmatmul.mubr.bf16.gmra.mrb[0].mxu0 %v964
        %v1248 = vpop.f32.mrb[0].mxu0
        %v1249 = vadd.f32 %v996, %v1248
        %v1250 = vpop.f32.mrb[0].mxu0
        %v1251 = vpop.f32.mrb[0].mxu0
        %v1252 = vadd.f32 %v996, %v1251
        %v1253 = vpop.f32.mrb[0].mxu0
        %1254 = vmatprep.mubr.bf16.mxu0 0
        %1255 = vmatmul.mubr.bf16.gmra.mrb[0].mxu0 %v965
        %v1256 = vpop.f32.mrb[0].mxu0
        %v1257 = vadd.f32 %v996, %v1256
        %v1258 = vpop.f32.mrb[0].mxu0
        %v1259 = vpop.f32.mrb[0].mxu0
        %v1260 = vadd.f32 %v996, %v1259
        %v1261 = vpop.f32.mrb[0].mxu0
        %1262 = vmatprep.mubr.bf16.mxu0 0
        %1263 = vmatmul.mubr.bf16.gmra.mrb[0].mxu0 %v966
        %v1264 = vpop.f32.mrb[0].mxu0
        %v1265 = vadd.f32 %v996, %v1264
        %v1266 = vpop.f32.mrb[0].mxu0
        %v1267 = vpop.f32.mrb[0].mxu0
        %v1268 = vadd.f32 %v996, %v1267
        %v1269 = vpop.f32.mrb[0].mxu0
        %1270 = vmatprep.mubr.bf16.mxu0 0
        %1271 = vmatmul.mubr.bf16.gmra.mrb[0].mxu0 %v967
        %v1272 = vpop.f32.mrb[0].mxu0
        %v1273 = vadd.f32 %v996, %v1272
        %v1274 = vpop.f32.mrb[0].mxu0
        %v1275 = vpop.f32.mrb[0].mxu0
        %v1276 = vadd.f32 %v996, %v1275
        %v1277 = vpop.f32.mrb[0].mxu0
        %1278 = vmatprep.mubr.bf16.mxu0 0
        %1279 = vmatmul.mubr.bf16.gmra.mrb[0].mxu0 %v968
        %v1280 = vpop.f32.mrb[0].mxu0
        %v1281 = vadd.f32 %v996, %v1280
        %v1282 = vpop.f32.mrb[0].mxu0
        %v1283 = vpop.f32.mrb[0].mxu0
        %v1284 = vadd.f32 %v996, %v1283
        %v1285 = vpop.f32.mrb[0].mxu0
        %1286 = vmatprep.mubr.bf16.mxu0 0
        %1287 = vmatmul.mubr.bf16.gmra.mrb[0].mxu0 %v969
        %v1288 = vpop.f32.mrb[0].mxu0
        %v1289 = vadd.f32 %v996, %v1288
        %v1290 = vpop.f32.mrb[0].mxu0
        %v1291 = vpop.f32.mrb[0].mxu0
        %v1292 = vadd.f32 %v996, %v1291
        %v1293 = vpop.f32.mrb[0].mxu0
        %1294 = vmatprep.mubr.bf16.mxu0 0
        %1295 = vmatmul.mubr.bf16.gmra.mrb[0].mxu0 %v970
        %v1296 = vpop.f32.mrb[0].mxu0
        %v1297 = vadd.f32 %v996, %v1296
        %v1298 = vpop.f32.mrb[0].mxu0
        %v1299 = vpop.f32.mrb[0].mxu0
        %v1300 = vadd.f32 %v996, %v1299
        %v1301 = vpop.f32.mrb[0].mxu0
        %1302 = vmatprep.mubr.bf16.mxu0 0
        %1303 = vmatmul.mubr.bf16.gmra.mrb[0].mxu0 %v971
        %v1304 = vpop.f32.mrb[0].mxu0
        %v1305 = vadd.f32 %v996, %v1304
        %v1306 = vpop.f32.mrb[0].mxu0
        %v1307 = vpop.f32.mrb[0].mxu0
        %v1308 = vadd.f32 %v996, %v1307
        %v1309 = vpop.f32.mrb[0].mxu0
        %1310 = vmatprep.mubr.bf16.mxu0 0
        %1311 = vmatmul.mubr.bf16.gmra.mrb[0].mxu0 %v972
        %v1312 = vpop.f32.mrb[0].mxu0
        %v1313 = vadd.f32 %v996, %v1312
        %v1314 = vpop.f32.mrb[0].mxu0
        %v1315 = vpop.f32.mrb[0].mxu0
        %v1316 = vadd.f32 %v996, %v1315
        %v1317 = vpop.f32.mrb[0].mxu0
        %1318 = vmatprep.mubr.bf16.mxu0 0
        %1319 = vmatmul.mubr.bf16.gmra.mrb[0].mxu0 %v973
        %v1320 = vpop.f32.mrb[0].mxu0
        %v1321 = vadd.f32 %v996, %v1320
        %v1322 = vpop.f32.mrb[0].mxu0
        %v1323 = vpop.f32.mrb[0].mxu0
        %v1324 = vadd.f32 %v996, %v1323
        %v1325 = vpop.f32.mrb[0].mxu0
        %1326 = vmatprep.mubr.bf16.mxu0 0
        %1327 = vmatmul.mubr.bf16.gmra.mrb[0].mxu0 %v974
        %v1328 = vpop.f32.mrb[0].mxu0
        %v1329 = vadd.f32 %v996, %v1328
        %v1330 = vpop.f32.mrb[0].mxu0
        %v1331 = vpop.f32.mrb[0].mxu0
        %v1332 = vpop.f32.mrb[0].mxu0
        %1333 = vdwg.mxu0
        %v1334 = vmax.f32 %v1081, 0.0
        %v1335 = vmax.f32 %v1084, 0.0
        %v1336 = vmax.f32 %v1089, 0.0
        %v1337 = vmax.f32 %v1092, 0.0
        %v1338 = vmax.f32 %v1097, 0.0
        %v1339 = vmax.f32 %v1100, 0.0
        %v1340 = vmax.f32 %v1105, 0.0
        %v1341 = vmax.f32 %v1108, 0.0
        %v1342 = vmax.f32 %v1113, 0.0
        %v1343 = vmax.f32 %v1116, 0.0
        %v1344 = vmax.f32 %v1121, 0.0
        %v1345 = vmax.f32 %v1124, 0.0
        %v1346 = vmax.f32 %v1129, 0.0
        %v1347 = vmax.f32 %v1132, 0.0
        %v1348 = vmax.f32 %v1137, 0.0
        %v1349 = vmax.f32 %v1140, 0.0
        %v1350 = vmax.f32 %v1145, 0.0
        %v1351 = vmax.f32 %v1148, 0.0
        %v1352 = vmax.f32 %v1153, 0.0
        %v1353 = vmax.f32 %v1156, 0.0
        %v1354 = vmax.f32 %v1161, 0.0
        %v1355 = vmax.f32 %v1164, 0.0
        %v1356 = vmax.f32 %v1169, 0.0
        %v1357 = vmax.f32 %v1172, 0.0
        %v1358 = vmax.f32 %v1177, 0.0
        %v1359 = vmax.f32 %v1180, 0.0
        %v1360 = vmax.f32 %v1185, 0.0
        %v1361 = vmax.f32 %v1188, 0.0
        %v1362 = vmax.f32 %v1193, 0.0
        %v1363 = vmax.f32 %v1196, 0.0
        %v1364 = vmax.f32 %v1201, 0.0
        %v1365 = vmax.f32 %v1204, 0.0
        %v1366 = vmax.f32 %v1209, 0.0
        %v1367 = vmax.f32 %v1212, 0.0
        %v1368 = vmax.f32 %v1217, 0.0
        %v1369 = vmax.f32 %v1220, 0.0
        %v1370 = vmax.f32 %v1225, 0.0
        %v1371 = vmax.f32 %v1228, 0.0
        %v1372 = vmax.f32 %v1233, 0.0
        %v1373 = vmax.f32 %v1236, 0.0
        %v1374 = vmax.f32 %v1241, 0.0
        %v1375 = vmax.f32 %v1244, 0.0
        %v1376 = vmax.f32 %v1249, 0.0
        %v1377 = vmax.f32 %v1252, 0.0
        %v1378 = vmax.f32 %v1257, 0.0
        %v1379 = vmax.f32 %v1260, 0.0
        %v1380 = vmax.f32 %v1265, 0.0
        %v1381 = vmax.f32 %v1268, 0.0
        %v1382 = vmax.f32 %v1273, 0.0
        %v1383 = vmax.f32 %v1276, 0.0
        %v1384 = vmax.f32 %v1281, 0.0
        %v1385 = vmax.f32 %v1284, 0.0
        %v1386 = vmax.f32 %v1289, 0.0
        %v1387 = vmax.f32 %v1292, 0.0
        %v1388 = vmax.f32 %v1297, 0.0
        %v1389 = vmax.f32 %v1300, 0.0
        %v1390 = vmax.f32 %v1305, 0.0
        %v1391 = vmax.f32 %v1308, 0.0
        %v1392 = vmax.f32 %v1313, 0.0
        %v1393 = vmax.f32 %v1316, 0.0
        %v1394 = vmax.f32 %v1321, 0.0
        %v1395 = vmax.f32 %v1324, 0.0
        %v1396 = vmax.f32 %v1329, 0.0
        %v1397 = vpack.c.bf16 %v1335, %v1334
        %v1398 = vpack.c.bf16 %v1337, %v1336
        %v1399 = vpack.c.bf16 %v1339, %v1338
        %v1400 = vpack.c.bf16 %v1341, %v1340
        %v1401 = vpack.c.bf16 %v1343, %v1342
        %v1402 = vpack.c.bf16 %v1345, %v1344
        %v1403 = vpack.c.bf16 %v1347, %v1346
        %v1404 = vpack.c.bf16 %v1349, %v1348
        %v1405 = vpack.c.bf16 %v1351, %v1350
        %v1406 = vpack.c.bf16 %v1353, %v1352
        %v1407 = vpack.c.bf16 %v1355, %v1354
        %v1408 = vpack.c.bf16 %v1357, %v1356
        %v1409 = vpack.c.bf16 %v1359, %v1358
        %v1410 = vpack.c.bf16 %v1361, %v1360
        %v1411 = vpack.c.bf16 %v1363, %v1362
        %v1412 = vpack.c.bf16 %v1365, %v1364
        %v1413 = vpack.c.bf16 %v1367, %v1366
        %v1414 = vpack.c.bf16 %v1369, %v1368
        %v1415 = vpack.c.bf16 %v1371, %v1370
        %v1416 = vpack.c.bf16 %v1373, %v1372
        %v1417 = vpack.c.bf16 %v1375, %v1374
        %v1418 = vpack.c.bf16 %v1377, %v1376
        %v1419 = vpack.c.bf16 %v1379, %v1378
        %v1420 = vpack.c.bf16 %v1381, %v1380
        %v1421 = vpack.c.bf16 %v1383, %v1382
        %v1422 = vpack.c.bf16 %v1385, %v1384
        %v1423 = vpack.c.bf16 %v1387, %v1386
        %v1424 = vpack.c.bf16 %v1389, %v1388
        %v1425 = vpack.c.bf16 %v1391, %v1390
        %v1426 = vpack.c.bf16 %v1393, %v1392
        %v1427 = vpack.c.bf16 %v1395, %v1394
        %v1428 = vpack.c.bf16 %v1396, %v1396
        %v1429 = vld [vmem:[#allocation8] sm:$0xf]
        %v1430 = vld [vmem:[#allocation8 + $0x4] sm:$0xf]
        %v1431 = vld [vmem:[#allocation8 + $0x8] sm:$0xf]
        %v1432 = vld [vmem:[#allocation8 + $0xc] sm:$0xf]
        %v1433 = vld [vmem:[#allocation8 + $0x10] sm:$0xf]
        %v1434 = vld [vmem:[#allocation8 + $0x14] sm:$0xf]
        %v1435 = vld [vmem:[#allocation8 + $0x18] sm:$0xf]
        %v1436 = vld [vmem:[#allocation8 + $0x1c] sm:$0xf]
        %v1437 = vld [vmem:[#allocation8 + $0x20] sm:$0xf]
        %v1438 = vld [vmem:[#allocation8 + $0x24] sm:$0xf]
        %v1439 = vld [vmem:[#allocation8 + $0x28] sm:$0xf]
        %v1440 = vld [vmem:[#allocation8 + $0x2c] sm:$0xf]
        %v1441 = vld [vmem:[#allocation8 + $0x30] sm:$0xf]
        %v1442 = vld [vmem:[#allocation8 + $0x34] sm:$0xf]
        %v1443 = vld [vmem:[#allocation8 + $0x38] sm:$0xf]
        %v1444 = vld [vmem:[#allocation8 + $0x3c] sm:$0xf]
        %v1445 = vld [vmem:[%s6] sm:$0x1]
        %v1447 = vlaneseq
        %v1448 = vshrl.u32 %v1447, 7
        %v1449 = vsub.s32 0, %v1448
        %v1450 = vrot.slane %v1445, %v1449
        %v1468 = vunpack.c.l.b16 %v1429
        %v1469 = vunpack.c.l.b16 %v1430
        %v1470 = vunpack.c.l.b16 %v1431
        %v1471 = vunpack.c.l.b16 %v1432
        %v1472 = vunpack.c.l.b16 %v1433
        %v1473 = vunpack.c.l.b16 %v1434
        %v1474 = vunpack.c.l.b16 %v1435
        %v1475 = vunpack.c.l.b16 %v1436
        %v1476 = vunpack.c.l.b16 %v1437
        %v1477 = vunpack.c.l.b16 %v1438
        %v1478 = vunpack.c.l.b16 %v1439
        %v1479 = vunpack.c.l.b16 %v1440
        %v1480 = vunpack.c.l.b16 %v1441
        %v1481 = vunpack.c.l.b16 %v1442
        %v1482 = vunpack.c.l.b16 %v1443
        %v1483 = vunpack.c.l.b16 %v1444
        %v1484 = vpack.c.b16 %v1469, %v1468
        %v1485 = vpack.c.b16 %v1471, %v1470
        %v1486 = vpack.c.b16 %v1473, %v1472
        %v1487 = vpack.c.b16 %v1475, %v1474
        %v1488 = vpack.c.b16 %v1477, %v1476
        %v1489 = vpack.c.b16 %v1479, %v1478
        %v1490 = vpack.c.b16 %v1481, %v1480
        %v1491 = vpack.c.b16 %v1483, %v1482
        %1500 = vmatprep.subr.bf16.mxu0 0
        %1501 = vmatpush1.bf16.msra.mxu0 %v1484
        %1502 = vmatprep.subr.bf16.mxu0 0
        %1503 = vmatpush1.bf16.msra.mxu0 %v1485
        %1504 = vmatprep.subr.bf16.mxu0 0
        %1505 = vmatpush1.bf16.msra.mxu0 %v1486
        %1506 = vmatprep.subr.bf16.mxu0 0
        %1507 = vmatpush1.bf16.msra.mxu0 %v1487
        %1508 = vmatprep.subr.bf16.mxu0 0
        %1509 = vmatpush1.bf16.msra.mxu0 %v1488
        %1510 = vmatprep.subr.bf16.mxu0 0
        %1511 = vmatpush1.bf16.msra.mxu0 %v1489
        %1512 = vmatprep.subr.bf16.mxu0 0
        %1513 = vmatpush1.bf16.msra.mxu0 %v1490
        %1514 = vmatprep.subr.bf16.mxu0 0
        %1515 = vmatpush1.bf16.msra.mxu0 %v1491
        %1516 = vmatprep.subr.bf16.mxu0 0
        %1517 = vmatpush1.bf16.msra.mxu0 0
        %1518 = vmatprep.subr.bf16.mxu0 0
        %1519 = vmatpush1.bf16.msra.mxu0 0
        %1520 = vmatprep.subr.bf16.mxu0 0
        %1521 = vmatpush1.bf16.msra.mxu0 0
        %1522 = vmatprep.subr.bf16.mxu0 0
        %1523 = vmatpush1.bf16.msra.mxu0 0
        %1524 = vmatprep.subr.bf16.mxu0 0
        %1525 = vmatpush1.bf16.msra.mxu0 0
        %1526 = vmatprep.subr.bf16.mxu0 0
        %1527 = vmatpush1.bf16.msra.mxu0 0
        %1528 = vmatprep.subr.bf16.mxu0 0
        %1529 = vmatpush1.bf16.msra.mxu0 0
        %1530 = vmatprep.subr.bf16.mxu0 0
        %1531 = vmatpush1.bf16.msra.mxu0 0
        %1532 = vmatprep.mubr.bf16.mxu0 0
        %1533 = vmatmul.mubr.bf16.gmra.mrb[0].mxu0 %v1397
        %v1534 = vpop.f32.mrb[0].mxu0
        %v1535 = vadd.f32 %v1450, %v1534
        %v1536 = vpop.f32.mrb[0].mxu0
        %v1537 = vpop.f32.mrb[0].mxu0
        %v1538 = vadd.f32 %v1450, %v1537
        %v1539 = vpop.f32.mrb[0].mxu0
        %1540 = vmatprep.mubr.bf16.mxu0 0
        %1541 = vmatmul.mubr.bf16.gmra.mrb[0].mxu0 %v1398
        %v1542 = vpop.f32.mrb[0].mxu0
        %v1543 = vadd.f32 %v1450, %v1542
        %v1544 = vpop.f32.mrb[0].mxu0
        %v1545 = vpop.f32.mrb[0].mxu0
        %v1546 = vadd.f32 %v1450, %v1545
        %v1547 = vpop.f32.mrb[0].mxu0
        %1548 = vmatprep.mubr.bf16.mxu0 0
        %1549 = vmatmul.mubr.bf16.gmra.mrb[0].mxu0 %v1399
        %v1550 = vpop.f32.mrb[0].mxu0
        %v1551 = vadd.f32 %v1450, %v1550
        %v1552 = vpop.f32.mrb[0].mxu0
        %v1553 = vpop.f32.mrb[0].mxu0
        %v1554 = vadd.f32 %v1450, %v1553
        %v1555 = vpop.f32.mrb[0].mxu0
        %1556 = vmatprep.mubr.bf16.mxu0 0
        %1557 = vmatmul.mubr.bf16.gmra.mrb[0].mxu0 %v1400
        %v1558 = vpop.f32.mrb[0].mxu0
        %v1559 = vadd.f32 %v1450, %v1558
        %v1560 = vpop.f32.mrb[0].mxu0
        %v1561 = vpop.f32.mrb[0].mxu0
        %v1562 = vadd.f32 %v1450, %v1561
        %v1563 = vpop.f32.mrb[0].mxu0
        %1564 = vmatprep.mubr.bf16.mxu0 0
        %1565 = vmatmul.mubr.bf16.gmra.mrb[0].mxu0 %v1401
        %v1566 = vpop.f32.mrb[0].mxu0
        %v1567 = vadd.f32 %v1450, %v1566
        %v1568 = vpop.f32.mrb[0].mxu0
        %v1569 = vpop.f32.mrb[0].mxu0
        %v1570 = vadd.f32 %v1450, %v1569
        %v1571 = vpop.f32.mrb[0].mxu0
        %1572 = vmatprep.mubr.bf16.mxu0 0
        %1573 = vmatmul.mubr.bf16.gmra.mrb[0].mxu0 %v1402
        %v1574 = vpop.f32.mrb[0].mxu0
        %v1575 = vadd.f32 %v1450, %v1574
        %v1576 = vpop.f32.mrb[0].mxu0
        %v1577 = vpop.f32.mrb[0].mxu0
        %v1578 = vadd.f32 %v1450, %v1577
        %v1579 = vpop.f32.mrb[0].mxu0
        %1580 = vmatprep.mubr.bf16.mxu0 0
        %1581 = vmatmul.mubr.bf16.gmra.mrb[0].mxu0 %v1403
        %v1582 = vpop.f32.mrb[0].mxu0
        %v1583 = vadd.f32 %v1450, %v1582
        %v1584 = vpop.f32.mrb[0].mxu0
        %v1585 = vpop.f32.mrb[0].mxu0
        %v1586 = vadd.f32 %v1450, %v1585
        %v1587 = vpop.f32.mrb[0].mxu0
        %1588 = vmatprep.mubr.bf16.mxu0 0
        %1589 = vmatmul.mubr.bf16.gmra.mrb[0].mxu0 %v1404
        %v1590 = vpop.f32.mrb[0].mxu0
        %v1591 = vadd.f32 %v1450, %v1590
        %v1592 = vpop.f32.mrb[0].mxu0
        %v1593 = vpop.f32.mrb[0].mxu0
        %v1594 = vadd.f32 %v1450, %v1593
        %v1595 = vpop.f32.mrb[0].mxu0
        %1596 = vmatprep.mubr.bf16.mxu0 0
        %1597 = vmatmul.mubr.bf16.gmra.mrb[0].mxu0 %v1405
        %v1598 = vpop.f32.mrb[0].mxu0
        %v1599 = vadd.f32 %v1450, %v1598
        %v1600 = vpop.f32.mrb[0].mxu0
        %v1601 = vpop.f32.mrb[0].mxu0
        %v1602 = vadd.f32 %v1450, %v1601
        %v1603 = vpop.f32.mrb[0].mxu0
        %1604 = vmatprep.mubr.bf16.mxu0 0
        %1605 = vmatmul.mubr.bf16.gmra.mrb[0].mxu0 %v1406
        %v1606 = vpop.f32.mrb[0].mxu0
        %v1607 = vadd.f32 %v1450, %v1606
        %v1608 = vpop.f32.mrb[0].mxu0
        %v1609 = vpop.f32.mrb[0].mxu0
        %v1610 = vadd.f32 %v1450, %v1609
        %v1611 = vpop.f32.mrb[0].mxu0
        %1612 = vmatprep.mubr.bf16.mxu0 0
        %1613 = vmatmul.mubr.bf16.gmra.mrb[0].mxu0 %v1407
        %v1614 = vpop.f32.mrb[0].mxu0
        %v1615 = vadd.f32 %v1450, %v1614
        %v1616 = vpop.f32.mrb[0].mxu0
        %v1617 = vpop.f32.mrb[0].mxu0
        %v1618 = vadd.f32 %v1450, %v1617
        %v1619 = vpop.f32.mrb[0].mxu0
        %1620 = vmatprep.mubr.bf16.mxu0 0
        %1621 = vmatmul.mubr.bf16.gmra.mrb[0].mxu0 %v1408
        %v1622 = vpop.f32.mrb[0].mxu0
        %v1623 = vadd.f32 %v1450, %v1622
        %v1624 = vpop.f32.mrb[0].mxu0
        %v1625 = vpop.f32.mrb[0].mxu0
        %v1626 = vadd.f32 %v1450, %v1625
        %v1627 = vpop.f32.mrb[0].mxu0
        %1628 = vmatprep.mubr.bf16.mxu0 0
        %1629 = vmatmul.mubr.bf16.gmra.mrb[0].mxu0 %v1409
        %v1630 = vpop.f32.mrb[0].mxu0
        %v1631 = vadd.f32 %v1450, %v1630
        %v1632 = vpop.f32.mrb[0].mxu0
        %v1633 = vpop.f32.mrb[0].mxu0
        %v1634 = vadd.f32 %v1450, %v1633
        %v1635 = vpop.f32.mrb[0].mxu0
        %1636 = vmatprep.mubr.bf16.mxu0 0
        %1637 = vmatmul.mubr.bf16.gmra.mrb[0].mxu0 %v1410
        %v1638 = vpop.f32.mrb[0].mxu0
        %v1639 = vadd.f32 %v1450, %v1638
        %v1640 = vpop.f32.mrb[0].mxu0
        %v1641 = vpop.f32.mrb[0].mxu0
        %v1642 = vadd.f32 %v1450, %v1641
        %v1643 = vpop.f32.mrb[0].mxu0
        %1644 = vmatprep.mubr.bf16.mxu0 0
        %1645 = vmatmul.mubr.bf16.gmra.mrb[0].mxu0 %v1411
        %v1646 = vpop.f32.mrb[0].mxu0
        %v1647 = vadd.f32 %v1450, %v1646
        %v1648 = vpop.f32.mrb[0].mxu0
        %v1649 = vpop.f32.mrb[0].mxu0
        %v1650 = vadd.f32 %v1450, %v1649
        %v1651 = vpop.f32.mrb[0].mxu0
        %1652 = vmatprep.mubr.bf16.mxu0 0
        %1653 = vmatmul.mubr.bf16.gmra.mrb[0].mxu0 %v1412
        %v1654 = vpop.f32.mrb[0].mxu0
        %v1655 = vadd.f32 %v1450, %v1654
        %v1656 = vpop.f32.mrb[0].mxu0
        %v1657 = vpop.f32.mrb[0].mxu0
        %v1658 = vadd.f32 %v1450, %v1657
        %v1659 = vpop.f32.mrb[0].mxu0
        %1660 = vmatprep.mubr.bf16.mxu0 0
        %1661 = vmatmul.mubr.bf16.gmra.mrb[0].mxu0 %v1413
        %v1662 = vpop.f32.mrb[0].mxu0
        %v1663 = vadd.f32 %v1450, %v1662
        %v1664 = vpop.f32.mrb[0].mxu0
        %v1665 = vpop.f32.mrb[0].mxu0
        %v1666 = vadd.f32 %v1450, %v1665
        %v1667 = vpop.f32.mrb[0].mxu0
        %1668 = vmatprep.mubr.bf16.mxu0 0
        %1669 = vmatmul.mubr.bf16.gmra.mrb[0].mxu0 %v1414
        %v1670 = vpop.f32.mrb[0].mxu0
        %v1671 = vadd.f32 %v1450, %v1670
        %v1672 = vpop.f32.mrb[0].mxu0
        %v1673 = vpop.f32.mrb[0].mxu0
        %v1674 = vadd.f32 %v1450, %v1673
        %v1675 = vpop.f32.mrb[0].mxu0
        %1676 = vmatprep.mubr.bf16.mxu0 0
        %1677 = vmatmul.mubr.bf16.gmra.mrb[0].mxu0 %v1415
        %v1678 = vpop.f32.mrb[0].mxu0
        %v1679 = vadd.f32 %v1450, %v1678
        %v1680 = vpop.f32.mrb[0].mxu0
        %v1681 = vpop.f32.mrb[0].mxu0
        %v1682 = vadd.f32 %v1450, %v1681
        %v1683 = vpop.f32.mrb[0].mxu0
        %1684 = vmatprep.mubr.bf16.mxu0 0
        %1685 = vmatmul.mubr.bf16.gmra.mrb[0].mxu0 %v1416
        %v1686 = vpop.f32.mrb[0].mxu0
        %v1687 = vadd.f32 %v1450, %v1686
        %v1688 = vpop.f32.mrb[0].mxu0
        %v1689 = vpop.f32.mrb[0].mxu0
        %v1690 = vadd.f32 %v1450, %v1689
        %v1691 = vpop.f32.mrb[0].mxu0
        %1692 = vmatprep.mubr.bf16.mxu0 0
        %1693 = vmatmul.mubr.bf16.gmra.mrb[0].mxu0 %v1417
        %v1694 = vpop.f32.mrb[0].mxu0
        %v1695 = vadd.f32 %v1450, %v1694
        %v1696 = vpop.f32.mrb[0].mxu0
        %v1697 = vpop.f32.mrb[0].mxu0
        %v1698 = vadd.f32 %v1450, %v1697
        %v1699 = vpop.f32.mrb[0].mxu0
        %1700 = vmatprep.mubr.bf16.mxu0 0
        %1701 = vmatmul.mubr.bf16.gmra.mrb[0].mxu0 %v1418
        %v1702 = vpop.f32.mrb[0].mxu0
        %v1703 = vadd.f32 %v1450, %v1702
        %v1704 = vpop.f32.mrb[0].mxu0
        %v1705 = vpop.f32.mrb[0].mxu0
        %v1706 = vadd.f32 %v1450, %v1705
        %v1707 = vpop.f32.mrb[0].mxu0
        %1708 = vmatprep.mubr.bf16.mxu0 0
        %1709 = vmatmul.mubr.bf16.gmra.mrb[0].mxu0 %v1419
        %v1710 = vpop.f32.mrb[0].mxu0
        %v1711 = vadd.f32 %v1450, %v1710
        %v1712 = vpop.f32.mrb[0].mxu0
        %v1713 = vpop.f32.mrb[0].mxu0
        %v1714 = vadd.f32 %v1450, %v1713
        %v1715 = vpop.f32.mrb[0].mxu0
        %1716 = vmatprep.mubr.bf16.mxu0 0
        %1717 = vmatmul.mubr.bf16.gmra.mrb[0].mxu0 %v1420
        %v1718 = vpop.f32.mrb[0].mxu0
        %v1719 = vadd.f32 %v1450, %v1718
        %v1720 = vpop.f32.mrb[0].mxu0
        %v1721 = vpop.f32.mrb[0].mxu0
        %v1722 = vadd.f32 %v1450, %v1721
        %v1723 = vpop.f32.mrb[0].mxu0
        %1724 = vmatprep.mubr.bf16.mxu0 0
        %1725 = vmatmul.mubr.bf16.gmra.mrb[0].mxu0 %v1421
        %v1726 = vpop.f32.mrb[0].mxu0
        %v1727 = vadd.f32 %v1450, %v1726
        %v1728 = vpop.f32.mrb[0].mxu0
        %v1729 = vpop.f32.mrb[0].mxu0
        %v1730 = vadd.f32 %v1450, %v1729
        %v1731 = vpop.f32.mrb[0].mxu0
        %1732 = vmatprep.mubr.bf16.mxu0 0
        %1733 = vmatmul.mubr.bf16.gmra.mrb[0].mxu0 %v1422
        %v1734 = vpop.f32.mrb[0].mxu0
        %v1735 = vadd.f32 %v1450, %v1734
        %v1736 = vpop.f32.mrb[0].mxu0
        %v1737 = vpop.f32.mrb[0].mxu0
        %v1738 = vadd.f32 %v1450, %v1737
        %v1739 = vpop.f32.mrb[0].mxu0
        %1740 = vmatprep.mubr.bf16.mxu0 0
        %1741 = vmatmul.mubr.bf16.gmra.mrb[0].mxu0 %v1423
        %v1742 = vpop.f32.mrb[0].mxu0
        %v1743 = vadd.f32 %v1450, %v1742
        %v1744 = vpop.f32.mrb[0].mxu0
        %v1745 = vpop.f32.mrb[0].mxu0
        %v1746 = vadd.f32 %v1450, %v1745
        %v1747 = vpop.f32.mrb[0].mxu0
        %1748 = vmatprep.mubr.bf16.mxu0 0
        %1749 = vmatmul.mubr.bf16.gmra.mrb[0].mxu0 %v1424
        %v1750 = vpop.f32.mrb[0].mxu0
        %v1751 = vadd.f32 %v1450, %v1750
        %v1752 = vpop.f32.mrb[0].mxu0
        %v1753 = vpop.f32.mrb[0].mxu0
        %v1754 = vadd.f32 %v1450, %v1753
        %v1755 = vpop.f32.mrb[0].mxu0
        %1756 = vmatprep.mubr.bf16.mxu0 0
        %1757 = vmatmul.mubr.bf16.gmra.mrb[0].mxu0 %v1425
        %v1758 = vpop.f32.mrb[0].mxu0
        %v1759 = vadd.f32 %v1450, %v1758
        %v1760 = vpop.f32.mrb[0].mxu0
        %v1761 = vpop.f32.mrb[0].mxu0
        %v1762 = vadd.f32 %v1450, %v1761
        %v1763 = vpop.f32.mrb[0].mxu0
        %1764 = vmatprep.mubr.bf16.mxu0 0
        %1765 = vmatmul.mubr.bf16.gmra.mrb[0].mxu0 %v1426
        %v1766 = vpop.f32.mrb[0].mxu0
        %v1767 = vadd.f32 %v1450, %v1766
        %v1768 = vpop.f32.mrb[0].mxu0
        %v1769 = vpop.f32.mrb[0].mxu0
        %v1770 = vadd.f32 %v1450, %v1769
        %v1771 = vpop.f32.mrb[0].mxu0
        %1772 = vmatprep.mubr.bf16.mxu0 0
        %1773 = vmatmul.mubr.bf16.gmra.mrb[0].mxu0 %v1427
        %v1774 = vpop.f32.mrb[0].mxu0
        %v1775 = vadd.f32 %v1450, %v1774
        %v1776 = vpop.f32.mrb[0].mxu0
        %v1777 = vpop.f32.mrb[0].mxu0
        %v1778 = vadd.f32 %v1450, %v1777
        %v1779 = vpop.f32.mrb[0].mxu0
        %1780 = vmatprep.mubr.bf16.mxu0 0
        %1781 = vmatmul.mubr.bf16.gmra.mrb[0].mxu0 %v1428
        %v1782 = vpop.f32.mrb[0].mxu0
        %v1783 = vadd.f32 %v1450, %v1782
        %v1784 = vpop.f32.mrb[0].mxu0
        %v1785 = vpop.f32.mrb[0].mxu0
        %v1786 = vpop.f32.mrb[0].mxu0
        %1787 = vdwg.mxu0
        %v1788 = vmax.f32 %v1535, 0.0
        %v1789 = vmax.f32 %v1538, 0.0
        %v1790 = vmax.f32 %v1543, 0.0
        %v1791 = vmax.f32 %v1546, 0.0
        %v1792 = vmax.f32 %v1551, 0.0
        %v1793 = vmax.f32 %v1554, 0.0
        %v1794 = vmax.f32 %v1559, 0.0
        %v1795 = vmax.f32 %v1562, 0.0
        %v1796 = vmax.f32 %v1567, 0.0
        %v1797 = vmax.f32 %v1570, 0.0
        %v1798 = vmax.f32 %v1575, 0.0
        %v1799 = vmax.f32 %v1578, 0.0
        %v1800 = vmax.f32 %v1583, 0.0
        %v1801 = vmax.f32 %v1586, 0.0
        %v1802 = vmax.f32 %v1591, 0.0
        %v1803 = vmax.f32 %v1594, 0.0
        %v1804 = vmax.f32 %v1599, 0.0
        %v1805 = vmax.f32 %v1602, 0.0
        %v1806 = vmax.f32 %v1607, 0.0
        %v1807 = vmax.f32 %v1610, 0.0
        %v1808 = vmax.f32 %v1615, 0.0
        %v1809 = vmax.f32 %v1618, 0.0
        %v1810 = vmax.f32 %v1623, 0.0
        %v1811 = vmax.f32 %v1626, 0.0
        %v1812 = vmax.f32 %v1631, 0.0
        %v1813 = vmax.f32 %v1634, 0.0
        %v1814 = vmax.f32 %v1639, 0.0
        %v1815 = vmax.f32 %v1642, 0.0
        %v1816 = vmax.f32 %v1647, 0.0
        %v1817 = vmax.f32 %v1650, 0.0
        %v1818 = vmax.f32 %v1655, 0.0
        %v1819 = vmax.f32 %v1658, 0.0
        %v1820 = vmax.f32 %v1663, 0.0
        %v1821 = vmax.f32 %v1666, 0.0
        %v1822 = vmax.f32 %v1671, 0.0
        %v1823 = vmax.f32 %v1674, 0.0
        %v1824 = vmax.f32 %v1679, 0.0
        %v1825 = vmax.f32 %v1682, 0.0
        %v1826 = vmax.f32 %v1687, 0.0
        %v1827 = vmax.f32 %v1690, 0.0
        %v1828 = vmax.f32 %v1695, 0.0
        %v1829 = vmax.f32 %v1698, 0.0
        %v1830 = vmax.f32 %v1703, 0.0
        %v1831 = vmax.f32 %v1706, 0.0
        %v1832 = vmax.f32 %v1711, 0.0
        %v1833 = vmax.f32 %v1714, 0.0
        %v1834 = vmax.f32 %v1719, 0.0
        %v1835 = vmax.f32 %v1722, 0.0
        %v1836 = vmax.f32 %v1727, 0.0
        %v1837 = vmax.f32 %v1730, 0.0
        %v1838 = vmax.f32 %v1735, 0.0
        %v1839 = vmax.f32 %v1738, 0.0
        %v1840 = vmax.f32 %v1743, 0.0
        %v1841 = vmax.f32 %v1746, 0.0
        %v1842 = vmax.f32 %v1751, 0.0
        %v1843 = vmax.f32 %v1754, 0.0
        %v1844 = vmax.f32 %v1759, 0.0
        %v1845 = vmax.f32 %v1762, 0.0
        %v1846 = vmax.f32 %v1767, 0.0
        %v1847 = vmax.f32 %v1770, 0.0
        %v1848 = vmax.f32 %v1775, 0.0
        %v1849 = vmax.f32 %v1778, 0.0
        %v1850 = vmax.f32 %v1783, 0.0
        %v1851 = vpack.c.bf16 %v1789, %v1788
        %v1852 = vpack.c.bf16 %v1791, %v1790
        %v1853 = vpack.c.bf16 %v1793, %v1792
        %v1854 = vpack.c.bf16 %v1795, %v1794
        %v1855 = vpack.c.bf16 %v1797, %v1796
        %v1856 = vpack.c.bf16 %v1799, %v1798
        %v1857 = vpack.c.bf16 %v1801, %v1800
        %v1858 = vpack.c.bf16 %v1803, %v1802
        %v1859 = vpack.c.bf16 %v1805, %v1804
        %v1860 = vpack.c.bf16 %v1807, %v1806
        %v1861 = vpack.c.bf16 %v1809, %v1808
        %v1862 = vpack.c.bf16 %v1811, %v1810
        %v1863 = vpack.c.bf16 %v1813, %v1812
        %v1864 = vpack.c.bf16 %v1815, %v1814
        %v1865 = vpack.c.bf16 %v1817, %v1816
        %v1866 = vpack.c.bf16 %v1819, %v1818
        %v1867 = vpack.c.bf16 %v1821, %v1820
        %v1868 = vpack.c.bf16 %v1823, %v1822
        %v1869 = vpack.c.bf16 %v1825, %v1824
        %v1870 = vpack.c.bf16 %v1827, %v1826
        %v1871 = vpack.c.bf16 %v1829, %v1828
        %v1872 = vpack.c.bf16 %v1831, %v1830
        %v1873 = vpack.c.bf16 %v1833, %v1832
        %v1874 = vpack.c.bf16 %v1835, %v1834
        %v1875 = vpack.c.bf16 %v1837, %v1836
        %v1876 = vpack.c.bf16 %v1839, %v1838
        %v1877 = vpack.c.bf16 %v1841, %v1840
        %v1878 = vpack.c.bf16 %v1843, %v1842
        %v1879 = vpack.c.bf16 %v1845, %v1844
        %v1880 = vpack.c.bf16 %v1847, %v1846
        %v1881 = vpack.c.bf16 %v1849, %v1848
        %v1882 = vpack.c.bf16 %v1850, %v1850
        %v1883 = vld [vmem:[#allocation10] sm:$0xf]
        %v1884 = vld [vmem:[#allocation10 + $0x4] sm:$0xf]
        %v1885 = vld [vmem:[#allocation10 + $0x8] sm:$0xf]
        %v1886 = vld [vmem:[#allocation10 + $0xc] sm:$0xf]
        %v1887 = vld [vmem:[#allocation10 + $0x10] sm:$0xf]
        %v1888 = vld [vmem:[#allocation10 + $0x14] sm:$0xf]
        %v1889 = vld [vmem:[#allocation10 + $0x18] sm:$0xf]
        %v1890 = vld [vmem:[#allocation10 + $0x1c] sm:$0xf]
        %v1891 = vld [vmem:[#allocation10 + $0x20] sm:$0xf]
        %v1892 = vld [vmem:[#allocation10 + $0x24] sm:$0xf]
        %v1893 = vld [vmem:[#allocation10 + $0x28] sm:$0xf]
        %v1894 = vld [vmem:[#allocation10 + $0x2c] sm:$0xf]
        %v1895 = vld [vmem:[#allocation10 + $0x30] sm:$0xf]
        %v1896 = vld [vmem:[#allocation10 + $0x34] sm:$0xf]
        %v1897 = vld [vmem:[#allocation10 + $0x38] sm:$0xf]
        %v1898 = vld [vmem:[#allocation10 + $0x3c] sm:$0xf]
        %v1899 = vld [vmem:[%s8] sm:$0x1]
        %v1901 = vlaneseq
        %v1902 = vshrl.u32 %v1901, 7
        %v1903 = vsub.s32 0, %v1902
        %v1904 = vrot.slane %v1899, %v1903
        %v1922 = vunpack.c.l.b16 %v1883
        %v1923 = vunpack.c.l.b16 %v1884
        %v1924 = vunpack.c.l.b16 %v1885
        %v1925 = vunpack.c.l.b16 %v1886
        %v1926 = vunpack.c.l.b16 %v1887
        %v1927 = vunpack.c.l.b16 %v1888
        %v1928 = vunpack.c.l.b16 %v1889
        %v1929 = vunpack.c.l.b16 %v1890
        %v1930 = vunpack.c.l.b16 %v1891
        %v1931 = vunpack.c.l.b16 %v1892
        %v1932 = vunpack.c.l.b16 %v1893
        %v1933 = vunpack.c.l.b16 %v1894
        %v1934 = vunpack.c.l.b16 %v1895
        %v1935 = vunpack.c.l.b16 %v1896
        %v1936 = vunpack.c.l.b16 %v1897
        %v1937 = vunpack.c.l.b16 %v1898
        %v1938 = vpack.c.b16 %v1923, %v1922
        %v1939 = vpack.c.b16 %v1925, %v1924
        %v1940 = vpack.c.b16 %v1927, %v1926
        %v1941 = vpack.c.b16 %v1929, %v1928
        %v1942 = vpack.c.b16 %v1931, %v1930
        %v1943 = vpack.c.b16 %v1933, %v1932
        %v1944 = vpack.c.b16 %v1935, %v1934
        %v1945 = vpack.c.b16 %v1937, %v1936
        %1954 = vmatprep.subr.bf16.mxu0 0
        %1955 = vmatpush1.bf16.msra.mxu0 %v1938
        %1956 = vmatprep.subr.bf16.mxu0 0
        %1957 = vmatpush1.bf16.msra.mxu0 %v1939
        %1958 = vmatprep.subr.bf16.mxu0 0
        %1959 = vmatpush1.bf16.msra.mxu0 %v1940
        %1960 = vmatprep.subr.bf16.mxu0 0
        %1961 = vmatpush1.bf16.msra.mxu0 %v1941
        %1962 = vmatprep.subr.bf16.mxu0 0
        %1963 = vmatpush1.bf16.msra.mxu0 %v1942
        %1964 = vmatprep.subr.bf16.mxu0 0
        %1965 = vmatpush1.bf16.msra.mxu0 %v1943
        %1966 = vmatprep.subr.bf16.mxu0 0
        %1967 = vmatpush1.bf16.msra.mxu0 %v1944
        %1968 = vmatprep.subr.bf16.mxu0 0
        %1969 = vmatpush1.bf16.msra.mxu0 %v1945
        %1970 = vmatprep.subr.bf16.mxu0 0
        %1971 = vmatpush1.bf16.msra.mxu0 0
        %1972 = vmatprep.subr.bf16.mxu0 0
        %1973 = vmatpush1.bf16.msra.mxu0 0
        %1974 = vmatprep.subr.bf16.mxu0 0
        %1975 = vmatpush1.bf16.msra.mxu0 0
        %1976 = vmatprep.subr.bf16.mxu0 0
        %1977 = vmatpush1.bf16.msra.mxu0 0
        %1978 = vmatprep.subr.bf16.mxu0 0
        %1979 = vmatpush1.bf16.msra.mxu0 0
        %1980 = vmatprep.subr.bf16.mxu0 0
        %1981 = vmatpush1.bf16.msra.mxu0 0
        %1982 = vmatprep.subr.bf16.mxu0 0
        %1983 = vmatpush1.bf16.msra.mxu0 0
        %1984 = vmatprep.subr.bf16.mxu0 0
        %1985 = vmatpush1.bf16.msra.mxu0 0
        %1986 = vmatprep.mubr.bf16.mxu0 0
        %1987 = vmatmul.mubr.bf16.gmra.mrb[0].mxu0 %v1851
        %v1988 = vpop.f32.mrb[0].mxu0
        %v1989 = vadd.f32 %v1904, %v1988
        %v1990 = vpop.f32.mrb[0].mxu0
        %v1991 = vpop.f32.mrb[0].mxu0
        %v1992 = vadd.f32 %v1904, %v1991
        %v1993 = vpop.f32.mrb[0].mxu0
        %1994 = vmatprep.mubr.bf16.mxu0 0
        %1995 = vmatmul.mubr.bf16.gmra.mrb[0].mxu0 %v1852
        %v1996 = vpop.f32.mrb[0].mxu0
        %v1997 = vadd.f32 %v1904, %v1996
        %v1998 = vpop.f32.mrb[0].mxu0
        %v1999 = vpop.f32.mrb[0].mxu0
        %v2000 = vadd.f32 %v1904, %v1999
        %v2001 = vpop.f32.mrb[0].mxu0
        %2002 = vmatprep.mubr.bf16.mxu0 0
        %2003 = vmatmul.mubr.bf16.gmra.mrb[0].mxu0 %v1853
        %v2004 = vpop.f32.mrb[0].mxu0
        %v2005 = vadd.f32 %v1904, %v2004
        %v2006 = vpop.f32.mrb[0].mxu0
        %v2007 = vpop.f32.mrb[0].mxu0
        %v2008 = vadd.f32 %v1904, %v2007
        %v2009 = vpop.f32.mrb[0].mxu0
        %2010 = vmatprep.mubr.bf16.mxu0 0
        %2011 = vmatmul.mubr.bf16.gmra.mrb[0].mxu0 %v1854
        %v2012 = vpop.f32.mrb[0].mxu0
        %v2013 = vadd.f32 %v1904, %v2012
        %v2014 = vpop.f32.mrb[0].mxu0
        %v2015 = vpop.f32.mrb[0].mxu0
        %v2016 = vadd.f32 %v1904, %v2015
        %v2017 = vpop.f32.mrb[0].mxu0
        %2018 = vmatprep.mubr.bf16.mxu0 0
        %2019 = vmatmul.mubr.bf16.gmra.mrb[0].mxu0 %v1855
        %v2020 = vpop.f32.mrb[0].mxu0
        %v2021 = vadd.f32 %v1904, %v2020
        %v2022 = vpop.f32.mrb[0].mxu0
        %v2023 = vpop.f32.mrb[0].mxu0
        %v2024 = vadd.f32 %v1904, %v2023
        %v2025 = vpop.f32.mrb[0].mxu0
        %2026 = vmatprep.mubr.bf16.mxu0 0
        %2027 = vmatmul.mubr.bf16.gmra.mrb[0].mxu0 %v1856
        %v2028 = vpop.f32.mrb[0].mxu0
        %v2029 = vadd.f32 %v1904, %v2028
        %v2030 = vpop.f32.mrb[0].mxu0
        %v2031 = vpop.f32.mrb[0].mxu0
        %v2032 = vadd.f32 %v1904, %v2031
        %v2033 = vpop.f32.mrb[0].mxu0
        %2034 = vmatprep.mubr.bf16.mxu0 0
        %2035 = vmatmul.mubr.bf16.gmra.mrb[0].mxu0 %v1857
        %v2036 = vpop.f32.mrb[0].mxu0
        %v2037 = vadd.f32 %v1904, %v2036
        %v2038 = vpop.f32.mrb[0].mxu0
        %v2039 = vpop.f32.mrb[0].mxu0
        %v2040 = vadd.f32 %v1904, %v2039
        %v2041 = vpop.f32.mrb[0].mxu0
        %2042 = vmatprep.mubr.bf16.mxu0 0
        %2043 = vmatmul.mubr.bf16.gmra.mrb[0].mxu0 %v1858
        %v2044 = vpop.f32.mrb[0].mxu0
        %v2045 = vadd.f32 %v1904, %v2044
        %v2046 = vpop.f32.mrb[0].mxu0
        %v2047 = vpop.f32.mrb[0].mxu0
        %v2048 = vadd.f32 %v1904, %v2047
        %v2049 = vpop.f32.mrb[0].mxu0
        %2050 = vmatprep.mubr.bf16.mxu0 0
        %2051 = vmatmul.mubr.bf16.gmra.mrb[0].mxu0 %v1859
        %v2052 = vpop.f32.mrb[0].mxu0
        %v2053 = vadd.f32 %v1904, %v2052
        %v2054 = vpop.f32.mrb[0].mxu0
        %v2055 = vpop.f32.mrb[0].mxu0
        %v2056 = vadd.f32 %v1904, %v2055
        %v2057 = vpop.f32.mrb[0].mxu0
        %2058 = vmatprep.mubr.bf16.mxu0 0
        %2059 = vmatmul.mubr.bf16.gmra.mrb[0].mxu0 %v1860
        %v2060 = vpop.f32.mrb[0].mxu0
        %v2061 = vadd.f32 %v1904, %v2060
        %v2062 = vpop.f32.mrb[0].mxu0
        %v2063 = vpop.f32.mrb[0].mxu0
        %v2064 = vadd.f32 %v1904, %v2063
        %v2065 = vpop.f32.mrb[0].mxu0
        %2066 = vmatprep.mubr.bf16.mxu0 0
        %2067 = vmatmul.mubr.bf16.gmra.mrb[0].mxu0 %v1861
        %v2068 = vpop.f32.mrb[0].mxu0
        %v2069 = vadd.f32 %v1904, %v2068
        %v2070 = vpop.f32.mrb[0].mxu0
        %v2071 = vpop.f32.mrb[0].mxu0
        %v2072 = vadd.f32 %v1904, %v2071
        %v2073 = vpop.f32.mrb[0].mxu0
        %2074 = vmatprep.mubr.bf16.mxu0 0
        %2075 = vmatmul.mubr.bf16.gmra.mrb[0].mxu0 %v1862
        %v2076 = vpop.f32.mrb[0].mxu0
        %v2077 = vadd.f32 %v1904, %v2076
        %v2078 = vpop.f32.mrb[0].mxu0
        %v2079 = vpop.f32.mrb[0].mxu0
        %v2080 = vadd.f32 %v1904, %v2079
        %v2081 = vpop.f32.mrb[0].mxu0
        %2082 = vmatprep.mubr.bf16.mxu0 0
        %2083 = vmatmul.mubr.bf16.gmra.mrb[0].mxu0 %v1863
        %v2084 = vpop.f32.mrb[0].mxu0
        %v2085 = vadd.f32 %v1904, %v2084
        %v2086 = vpop.f32.mrb[0].mxu0
        %v2087 = vpop.f32.mrb[0].mxu0
        %v2088 = vadd.f32 %v1904, %v2087
        %v2089 = vpop.f32.mrb[0].mxu0
        %2090 = vmatprep.mubr.bf16.mxu0 0
        %2091 = vmatmul.mubr.bf16.gmra.mrb[0].mxu0 %v1864
        %v2092 = vpop.f32.mrb[0].mxu0
        %v2093 = vadd.f32 %v1904, %v2092
        %v2094 = vpop.f32.mrb[0].mxu0
        %v2095 = vpop.f32.mrb[0].mxu0
        %v2096 = vadd.f32 %v1904, %v2095
        %v2097 = vpop.f32.mrb[0].mxu0
        %2098 = vmatprep.mubr.bf16.mxu0 0
        %2099 = vmatmul.mubr.bf16.gmra.mrb[0].mxu0 %v1865
        %v2100 = vpop.f32.mrb[0].mxu0
        %v2101 = vadd.f32 %v1904, %v2100
        %v2102 = vpop.f32.mrb[0].mxu0
        %v2103 = vpop.f32.mrb[0].mxu0
        %v2104 = vadd.f32 %v1904, %v2103
        %v2105 = vpop.f32.mrb[0].mxu0
        %2106 = vmatprep.mubr.bf16.mxu0 0
        %2107 = vmatmul.mubr.bf16.gmra.mrb[0].mxu0 %v1866
        %v2108 = vpop.f32.mrb[0].mxu0
        %v2109 = vadd.f32 %v1904, %v2108
        %v2110 = vpop.f32.mrb[0].mxu0
        %v2111 = vpop.f32.mrb[0].mxu0
        %v2112 = vadd.f32 %v1904, %v2111
        %v2113 = vpop.f32.mrb[0].mxu0
        %2114 = vmatprep.mubr.bf16.mxu0 0
        %2115 = vmatmul.mubr.bf16.gmra.mrb[0].mxu0 %v1867
        %v2116 = vpop.f32.mrb[0].mxu0
        %v2117 = vadd.f32 %v1904, %v2116
        %v2118 = vpop.f32.mrb[0].mxu0
        %v2119 = vpop.f32.mrb[0].mxu0
        %v2120 = vadd.f32 %v1904, %v2119
        %v2121 = vpop.f32.mrb[0].mxu0
        %2122 = vmatprep.mubr.bf16.mxu0 0
        %2123 = vmatmul.mubr.bf16.gmra.mrb[0].mxu0 %v1868
        %v2124 = vpop.f32.mrb[0].mxu0
        %v2125 = vadd.f32 %v1904, %v2124
        %v2126 = vpop.f32.mrb[0].mxu0
        %v2127 = vpop.f32.mrb[0].mxu0
        %v2128 = vadd.f32 %v1904, %v2127
        %v2129 = vpop.f32.mrb[0].mxu0
        %2130 = vmatprep.mubr.bf16.mxu0 0
        %2131 = vmatmul.mubr.bf16.gmra.mrb[0].mxu0 %v1869
        %v2132 = vpop.f32.mrb[0].mxu0
        %v2133 = vadd.f32 %v1904, %v2132
        %v2134 = vpop.f32.mrb[0].mxu0
        %v2135 = vpop.f32.mrb[0].mxu0
        %v2136 = vadd.f32 %v1904, %v2135
        %v2137 = vpop.f32.mrb[0].mxu0
        %2138 = vmatprep.mubr.bf16.mxu0 0
        %2139 = vmatmul.mubr.bf16.gmra.mrb[0].mxu0 %v1870
        %v2140 = vpop.f32.mrb[0].mxu0
        %v2141 = vadd.f32 %v1904, %v2140
        %v2142 = vpop.f32.mrb[0].mxu0
        %v2143 = vpop.f32.mrb[0].mxu0
        %v2144 = vadd.f32 %v1904, %v2143
        %v2145 = vpop.f32.mrb[0].mxu0
        %2146 = vmatprep.mubr.bf16.mxu0 0
        %2147 = vmatmul.mubr.bf16.gmra.mrb[0].mxu0 %v1871
        %v2148 = vpop.f32.mrb[0].mxu0
        %v2149 = vadd.f32 %v1904, %v2148
        %v2150 = vpop.f32.mrb[0].mxu0
        %v2151 = vpop.f32.mrb[0].mxu0
        %v2152 = vadd.f32 %v1904, %v2151
        %v2153 = vpop.f32.mrb[0].mxu0
        %2154 = vmatprep.mubr.bf16.mxu0 0
        %2155 = vmatmul.mubr.bf16.gmra.mrb[0].mxu0 %v1872
        %v2156 = vpop.f32.mrb[0].mxu0
        %v2157 = vadd.f32 %v1904, %v2156
        %v2158 = vpop.f32.mrb[0].mxu0
        %v2159 = vpop.f32.mrb[0].mxu0
        %v2160 = vadd.f32 %v1904, %v2159
        %v2161 = vpop.f32.mrb[0].mxu0
        %2162 = vmatprep.mubr.bf16.mxu0 0
        %2163 = vmatmul.mubr.bf16.gmra.mrb[0].mxu0 %v1873
        %v2164 = vpop.f32.mrb[0].mxu0
        %v2165 = vadd.f32 %v1904, %v2164
        %v2166 = vpop.f32.mrb[0].mxu0
        %v2167 = vpop.f32.mrb[0].mxu0
        %v2168 = vadd.f32 %v1904, %v2167
        %v2169 = vpop.f32.mrb[0].mxu0
        %2170 = vmatprep.mubr.bf16.mxu0 0
        %2171 = vmatmul.mubr.bf16.gmra.mrb[0].mxu0 %v1874
        %v2172 = vpop.f32.mrb[0].mxu0
        %v2173 = vadd.f32 %v1904, %v2172
        %v2174 = vpop.f32.mrb[0].mxu0
        %v2175 = vpop.f32.mrb[0].mxu0
        %v2176 = vadd.f32 %v1904, %v2175
        %v2177 = vpop.f32.mrb[0].mxu0
        %2178 = vmatprep.mubr.bf16.mxu0 0
        %2179 = vmatmul.mubr.bf16.gmra.mrb[0].mxu0 %v1875
        %v2180 = vpop.f32.mrb[0].mxu0
        %v2181 = vadd.f32 %v1904, %v2180
        %v2182 = vpop.f32.mrb[0].mxu0
        %v2183 = vpop.f32.mrb[0].mxu0
        %v2184 = vadd.f32 %v1904, %v2183
        %v2185 = vpop.f32.mrb[0].mxu0
        %2186 = vmatprep.mubr.bf16.mxu0 0
        %2187 = vmatmul.mubr.bf16.gmra.mrb[0].mxu0 %v1876
        %v2188 = vpop.f32.mrb[0].mxu0
        %v2189 = vadd.f32 %v1904, %v2188
        %v2190 = vpop.f32.mrb[0].mxu0
        %v2191 = vpop.f32.mrb[0].mxu0
        %v2192 = vadd.f32 %v1904, %v2191
        %v2193 = vpop.f32.mrb[0].mxu0
        %2194 = vmatprep.mubr.bf16.mxu0 0
        %2195 = vmatmul.mubr.bf16.gmra.mrb[0].mxu0 %v1877
        %v2196 = vpop.f32.mrb[0].mxu0
        %v2197 = vadd.f32 %v1904, %v2196
        %v2198 = vpop.f32.mrb[0].mxu0
        %v2199 = vpop.f32.mrb[0].mxu0
        %v2200 = vadd.f32 %v1904, %v2199
        %v2201 = vpop.f32.mrb[0].mxu0
        %2202 = vmatprep.mubr.bf16.mxu0 0
        %2203 = vmatmul.mubr.bf16.gmra.mrb[0].mxu0 %v1878
        %v2204 = vpop.f32.mrb[0].mxu0
        %v2205 = vadd.f32 %v1904, %v2204
        %v2206 = vpop.f32.mrb[0].mxu0
        %v2207 = vpop.f32.mrb[0].mxu0
        %v2208 = vadd.f32 %v1904, %v2207
        %v2209 = vpop.f32.mrb[0].mxu0
        %2210 = vmatprep.mubr.bf16.mxu0 0
        %2211 = vmatmul.mubr.bf16.gmra.mrb[0].mxu0 %v1879
        %v2212 = vpop.f32.mrb[0].mxu0
        %v2213 = vadd.f32 %v1904, %v2212
        %v2214 = vpop.f32.mrb[0].mxu0
        %v2215 = vpop.f32.mrb[0].mxu0
        %v2216 = vadd.f32 %v1904, %v2215
        %v2217 = vpop.f32.mrb[0].mxu0
        %2218 = vmatprep.mubr.bf16.mxu0 0
        %2219 = vmatmul.mubr.bf16.gmra.mrb[0].mxu0 %v1880
        %v2220 = vpop.f32.mrb[0].mxu0
        %v2221 = vadd.f32 %v1904, %v2220
        %v2222 = vpop.f32.mrb[0].mxu0
        %v2223 = vpop.f32.mrb[0].mxu0
        %v2224 = vadd.f32 %v1904, %v2223
        %v2225 = vpop.f32.mrb[0].mxu0
        %2226 = vmatprep.mubr.bf16.mxu0 0
        %2227 = vmatmul.mubr.bf16.gmra.mrb[0].mxu0 %v1881
        %v2228 = vpop.f32.mrb[0].mxu0
        %v2229 = vadd.f32 %v1904, %v2228
        %v2230 = vpop.f32.mrb[0].mxu0
        %v2231 = vpop.f32.mrb[0].mxu0
        %v2232 = vadd.f32 %v1904, %v2231
        %v2233 = vpop.f32.mrb[0].mxu0
        %2234 = vmatprep.mubr.bf16.mxu0 0
        %2235 = vmatmul.mubr.bf16.gmra.mrb[0].mxu0 %v1882
        %v2236 = vpop.f32.mrb[0].mxu0
        %v2237 = vadd.f32 %v1904, %v2236
        %v2238 = vpop.f32.mrb[0].mxu0
        %v2239 = vpop.f32.mrb[0].mxu0
        %v2240 = vpop.f32.mrb[0].mxu0
        %2241 = vdwg.mxu0
        %2242 = vst [vmem:[%s414] sm:$0xff] %v1989
        %2243 = vst [vmem:[%s414 + $0x8] sm:$0xff] %v1992
        %2244 = vst [vmem:[%s414 + $0x10] sm:$0xff] %v1997
        %2245 = vst [vmem:[%s414 + $0x18] sm:$0xff] %v2000
        %2246 = vst [vmem:[%s414 + $0x20] sm:$0xff] %v2005
        %2247 = vst [vmem:[%s414 + $0x28] sm:$0xff] %v2008
        %2248 = vst [vmem:[%s414 + $0x30] sm:$0xff] %v2013
        %2249 = vst [vmem:[%s414 + $0x38] sm:$0xff] %v2016
        %2250 = vst [vmem:[%s414 + $0x40] sm:$0xff] %v2021
        %2251 = vst [vmem:[%s414 + $0x48] sm:$0xff] %v2024
        %2252 = vst [vmem:[%s414 + $0x50] sm:$0xff] %v2029
        %2253 = vst [vmem:[%s414 + $0x58] sm:$0xff] %v2032
        %2254 = vst [vmem:[%s414 + $0x60] sm:$0xff] %v2037
        %2255 = vst [vmem:[%s414 + $0x68] sm:$0xff] %v2040
        %2256 = vst [vmem:[%s414 + $0x70] sm:$0xff] %v2045
        %2257 = vst [vmem:[%s414 + $0x78] sm:$0xff] %v2048
        %2258 = vst [vmem:[%s414 + $0x80] sm:$0xff] %v2053
        %2259 = vst [vmem:[%s414 + $0x88] sm:$0xff] %v2056
        %2260 = vst [vmem:[%s414 + $0x90] sm:$0xff] %v2061
        %2261 = vst [vmem:[%s414 + $0x98] sm:$0xff] %v2064
        %2262 = vst [vmem:[%s414 + $0xa0] sm:$0xff] %v2069
        %2263 = vst [vmem:[%s414 + $0xa8] sm:$0xff] %v2072
        %2264 = vst [vmem:[%s414 + $0xb0] sm:$0xff] %v2077
        %2265 = vst [vmem:[%s414 + $0xb8] sm:$0xff] %v2080
        %2266 = vst [vmem:[%s414 + $0xc0] sm:$0xff] %v2085
        %2267 = vst [vmem:[%s414 + $0xc8] sm:$0xff] %v2088
        %2268 = vst [vmem:[%s414 + $0xd0] sm:$0xff] %v2093
        %2269 = vst [vmem:[%s414 + $0xd8] sm:$0xff] %v2096
        %2270 = vst [vmem:[%s414 + $0xe0] sm:$0xff] %v2101
        %2271 = vst [vmem:[%s414 + $0xe8] sm:$0xff] %v2104
        %2272 = vst [vmem:[%s414 + $0xf0] sm:$0xff] %v2109
        %2273 = vst [vmem:[%s414 + $0xf8] sm:$0xff] %v2112
        %2274 = vst [vmem:[%s414 + $0x100] sm:$0xff] %v2117
        %2275 = vst [vmem:[%s414 + $0x108] sm:$0xff] %v2120
        %2276 = vst [vmem:[%s414 + $0x110] sm:$0xff] %v2125
        %2277 = vst [vmem:[%s414 + $0x118] sm:$0xff] %v2128
        %2278 = vst [vmem:[%s414 + $0x120] sm:$0xff] %v2133
        %2279 = vst [vmem:[%s414 + $0x128] sm:$0xff] %v2136
        %2280 = vst [vmem:[%s414 + $0x130] sm:$0xff] %v2141
        %2281 = vst [vmem:[%s414 + $0x138] sm:$0xff] %v2144
        %2282 = vst [vmem:[%s414 + $0x140] sm:$0xff] %v2149
        %2283 = vst [vmem:[%s414 + $0x148] sm:$0xff] %v2152
        %2284 = vst [vmem:[%s414 + $0x150] sm:$0xff] %v2157
        %2285 = vst [vmem:[%s414 + $0x158] sm:$0xff] %v2160
        %2286 = vst [vmem:[%s414 + $0x160] sm:$0xff] %v2165
        %2287 = vst [vmem:[%s414 + $0x168] sm:$0xff] %v2168
        %2288 = vst [vmem:[%s414 + $0x170] sm:$0xff] %v2173
        %2289 = vst [vmem:[%s414 + $0x178] sm:$0xff] %v2176
        %2290 = vst [vmem:[%s414 + $0x180] sm:$0xff] %v2181
        %2291 = vst [vmem:[%s414 + $0x188] sm:$0xff] %v2184
        %2292 = vst [vmem:[%s414 + $0x190] sm:$0xff] %v2189
        %2293 = vst [vmem:[%s414 + $0x198] sm:$0xff] %v2192
        %2294 = vst [vmem:[%s414 + $0x1a0] sm:$0xff] %v2197
        %2295 = vst [vmem:[%s414 + $0x1a8] sm:$0xff] %v2200
        %2296 = vst [vmem:[%s414 + $0x1b0] sm:$0xff] %v2205
        %2297 = vst [vmem:[%s414 + $0x1b8] sm:$0xff] %v2208
        %2298 = vst [vmem:[%s414 + $0x1c0] sm:$0xff] %v2213
        %2299 = vst [vmem:[%s414 + $0x1c8] sm:$0xff] %v2216
        %2300 = vst [vmem:[%s414 + $0x1d0] sm:$0xff] %v2221
        %2301 = vst [vmem:[%s414 + $0x1d8] sm:$0xff] %v2224
        %2302 = vst [vmem:[%s414 + $0x1e0] sm:$0xff] %v2229
        %2303 = vst [vmem:[%s414 + $0x1e8] sm:$0xff] %v2232
        %2304 = vst [vmem:[%s414 + $0x1f0] sm:$0xff] %v2237
        %s2305 = sand.u32 %s230, 1
        %s2306 = scalar_lea.sflag [#allocation4], %s2305
        %s2307 = sand.u32 %s230, 1
        %s2308 = smul.addr %s2307, 504
        %s2309 = scalar_lea.vmem [#allocation11], %s2308
        // Predicated region
        $region77: #{tpu_custom_call.1} parent=55 // pred_check
          %p2310 = pneg %p240
        $region78: #{tpu_custom_call.1} parent=55 // pred_check_branch
          %2312 = sbr.rel (%p2310) target = $region80
        $region79: #{tpu_custom_call.1} parent=55 // pred_region
          %s2313 = smul.u32 63, %s28
          %s2314 = ssub.s32 125, %s2313
          %p2315 = scmp.lt.s32.totalorder %s2314, 63
          %s2316 = scalar_select %p2315, %s2314, 63
          %s2317 = smul.u32 128, %s2316
          %s2319 = ssub.s32 8064, %s2317
          %2320 = vsyncadd %s2306, %s2319
          %p2321 = scmp.ne.s32.totalorder 0, %s2317
          %s2322 = smul.addr %s2313, 128
          %s2323 = scalar_lea.hbm %s9, %s2322
          %s2324 = smul.u32 8, %s2316
          %s2325 = sshll.u32 %s2309, 4
          %s2326 = int_to_ptr.vmem [resolvable:$true] %s2325
          %s2327 = sshll.u32 %s2324, 4
          %2331 = dma.vmem_to_hbm [thread:$0]  (%p2321), %s2326, %s2327, %s2323, %s2306, 128, 128, 8
        $region80: #{tpu_custom_call.1} parent=55 // pred_fallthru
          _
      $region56: #{tpu_custom_call.1} parent=5 // pred_fallthru
        _
      %p2332 = scmp.le.s32.totalorder 2, %s23
      // Predicated region
      $region81: #{tpu_custom_call.1} parent=5 // pred_check
        %p2333 = pneg %p2332
      $region82: #{tpu_custom_call.1} parent=5 // pred_check_branch
        %2335 = sbr.rel (%p2333) target = $region84
      $region83: #{tpu_custom_call.1} parent=5 // pred_region
        %s2336 = ssub.s32 %s23, 2
        // Predicated region
        $region85: #{tpu_custom_call.1} parent=83 // pred_check
          %p2337 = pneg %p246
        $region86: #{tpu_custom_call.1} parent=83 // pred_check_branch
          %2339 = sbr.rel (%p2337) target = $region88
        $region87: #{tpu_custom_call.1} parent=83 // pred_region
          %s2340 = sand.u32 %s231, 1
          %s2341 = scalar_lea.sflag [#allocation4], %s2340
          %s2342 = sand.u32 %s231, 1
          %s2343 = smul.addr %s2342, 504
          %s2344 = scalar_lea.vmem [#allocation11], %s2343
          %2345 = dma.done %s2341, 8064
        $region88: #{tpu_custom_call.1} parent=83 // pred_fallthru
          _
      $region84: #{tpu_custom_call.1} parent=5 // pred_fallthru
        _
    $region6: #{tpu_custom_call.1} parent=1 // loop_footer
      %s27 = sadd.s32 1, %s23
    $region7: #{tpu_custom_call.1} parent=1 // loop_footer_branch
      %22 = sbr.rel target = $region3
    $region8: #{tpu_custom_call.1} parent=1 // loop_exit
      _
    %2346 = vsyncpa [#allocation3], 1
    %s2347 = scalar_lea.sflag [#allocation3], 1
    %2348 = vsyncpa %s2347, 1
    %2349 = vsyncpa [#allocation6], 1
    %2350 = vsyncpa [#allocation9], 1
    %2351 = vsyncpa [#allocation4], 1
    %s2352 = scalar_lea.sflag [#allocation4], 1
    %2353 = vsyncpa %s2352, 1

</llo_original>
